<compile_context>
chip_gen: v7x
topology: tpu7x:2x2x1
jax: 0.10.0
libtpu: 0.0.40
codegen_flags: <defaults>
</compile_context>

<pallas_src>
import numpy as np
import jax
import jax.numpy as jnp
from jax import lax
from jax.experimental import pallas as pl
from jax.experimental.pallas import tpu as pltpu

EPS = 1e-5
POOL_K = 5       # AvgPool2d kernel size
POOL_S = 2       # AvgPool2d stride (ImageNet head)
C_MID = 128      # Conv1 output channels
C_OUT = 768      # Conv2 output channels


def _round_up(n, m):
    return (n + m - 1) // m * m


# --------------------------- fused Pallas kernel ------------------------------
def _make_aux_kernel(H, W, TB, C_pad):
    """ReLU -> AvgPool(5, s=2) -> 1x1 conv -> BN -> ReLU -> 2x2 conv -> BN
       -> ReLU -> Linear, all fused, for one batch tile of TB rows."""
    PH = (H - POOL_K) // POOL_S + 1
    PW = (W - POOL_K) // POOL_S + 1
    inv_area = 1.0 / float(POOL_K * POOL_K)   # padding=0 -> divisor is always 25

    def kernel(x_ref, w1_ref, t1_ref, w2_ref, t2_ref, wc_ref, bc_ref, out_ref):
        # x_ref: (H*W, TB, C_pad) bf16, rows spatial-major / batch-minor.
        # ReLU once in f32 (each spatial position is reused by up to 4 windows).
        xr = jnp.maximum(x_ref[...].astype(jnp.float32), 0.0)
        t1 = t1_ref[...]                                   # (1, 128)  f32
        t2 = t2_ref[...]                                   # (1, 768)  f32

        # Accumulator of the 2x2 conv over its 4 spatial taps (f32).
        acc2 = jnp.zeros((TB, C_OUT), jnp.float32)
        for ph in range(PH):
            for pw in range(PW):
                p = ph * PW + pw
                # Exact 5x5 average (no padding -> count_include_pad irrelevant),
                # computed as sums of contiguous spatial slabs (batch-independent).
                win = jnp.zeros((TB, C_pad), jnp.float32)
                for kh in range(POOL_K):
                    r0 = (ph * POOL_S + kh) * W + pw * POOL_S
                    win = win + jnp.sum(xr[r0:r0 + POOL_K], axis=0)
                pooled = win * inv_area                     # (TB, C_pad)
                # 1x1 conv (BN1 scale folded into w1) + shift + ReLU
                h1 = jnp.dot(pooled.astype(jnp.bfloat16), w1_ref[...],
                             preferred_element_type=jnp.float32)
                h1 = jnp.maximum(h1 + t1, 0.0)              # (TB, 128)
                # 2x2 conv contribution of tap p (BN2 scale folded into w2)
                acc2 = acc2 + jnp.dot(h1.astype(jnp.bfloat16), w2_ref[p],
                                      preferred_element_type=jnp.float32)
        h2 = jnp.maximum(acc2 + t2, 0.0)                    # (TB, 768)
        # Classifier, lane-padded to a 128-wide output (unmasked stores).
        out_ref[...] = (jnp.dot(h2.astype(jnp.bfloat16), wc_ref[...],
                                preferred_element_type=jnp.float32)
                        + bc_ref[...])

    return kernel


# ------------------------------- wrapper --------------------------------------
def auxiliary_head_imagenet(x, params):
    """x: (B, C, H, W) float32 NCHW -> logits (B, num_classes)."""
    B, C, H, W = x.shape
    num_classes = params["bc"].shape[0]
    PH = (H - POOL_K) // POOL_S + 1
    PW = (W - POOL_K) // POOL_S + 1
    assert PH == 2 and PW == 2, (
        "AuxiliaryHeadImageNet's Linear(768, .) requires a 2x2 pooled map "
        f"(e.g. 7x7 input); got pooled {PH}x{PW} from input {H}x{W}")

    C_pad = _round_up(C, 128)
    NC_pad = _round_up(num_classes, 128)

    # Batch tiling: one tile when B <= 128, else 128-row (8-sublane aligned) tiles.
    if B <= 128:
        TB, B_pad = B, B
    else:
        TB = 128
        B_pad = _round_up(B, TB)
    n_tiles = B_pad // TB

    # ---- layout glue (plain JAX): NCHW -> (H*W, B_pad, C_pad), bf16 ----
    x3 = jnp.transpose(x, (2, 3, 0, 1)).reshape(H * W, B, C)
    x3 = jnp.pad(x3, ((0, 0), (0, B_pad - B), (0, C_pad - C))).astype(jnp.bfloat16)

    # ---- fold BN (inference running stats) into the conv weights ----
    s1 = params["g1"] / jnp.sqrt(params["v1"] + EPS)                  # (128,)
    w1f = params["w1"].reshape(C_MID, C).T * s1[None, :]              # (C, 128)
    w1f = jnp.pad(w1f, ((0, C_pad - C), (0, 0))).astype(jnp.bfloat16)
    t1 = (params["b1"] - params["m1"] * s1).reshape(1, C_MID).astype(jnp.float32)

    s2 = params["g2"] / jnp.sqrt(params["v2"] + EPS)                  # (768,)
    # (768, 128, 2, 2) -> (kh, kw, c_in, c_out) -> (4, 128, 768), scale folded
    w2f = (jnp.transpose(params["w2"], (2, 3, 1, 0)).reshape(PH * PW, C_MID, C_OUT)
           * s2[None, None, :]).astype(jnp.bfloat16)
    t2 = (params["b2"] - params["m2"] * s2).reshape(1, C_OUT).astype(jnp.float32)

    wcf = jnp.pad(params["wc"].T,
                  ((0, 0), (0, NC_pad - num_classes))).astype(jnp.bfloat16)
    bcf = jnp.pad(params["bc"],
                  ((0, NC_pad - num_classes),)).reshape(1, NC_pad).astype(jnp.float32)

    kernel = _make_aux_kernel(H, W, TB, C_pad)

    flops = 2 * B_pad * (PH * PW * (C_pad * C_MID + C_MID * C_OUT) + C_OUT * NC_pad)
    bytes_accessed = (2 * (x3.size + w1f.size + w2f.size + wcf.size)
                      + 4 * (t1.size + t2.size + bcf.size + B_pad * NC_pad))

    logits_pad = pl.pallas_call(
        kernel,
        out_shape=jax.ShapeDtypeStruct((B_pad, NC_pad), jnp.float32),
        grid=(n_tiles,),
        in_specs=[
            pl.BlockSpec((H * W, TB, C_pad), lambda i: (0, i, 0)),        # x tile
            pl.BlockSpec((C_pad, C_MID), lambda i: (0, 0)),               # w1 (resident)
            pl.BlockSpec((1, C_MID), lambda i: (0, 0)),                   # t1
            pl.BlockSpec((PH * PW, C_MID, C_OUT), lambda i: (0, 0, 0)),   # w2 (resident)
            pl.BlockSpec((1, C_OUT), lambda i: (0, 0)),                   # t2
            pl.BlockSpec((C_OUT, NC_pad), lambda i: (0, 0)),              # wc (resident)
            pl.BlockSpec((1, NC_pad), lambda i: (0, 0)),                  # bc
        ],
        out_specs=pl.BlockSpec((TB, NC_pad), lambda i: (i, 0)),
        compiler_params=pltpu.CompilerParams(
            dimension_semantics=("parallel",)),
        cost_estimate=pl.CostEstimate(flops=int(flops), transcendentals=0,
                                      bytes_accessed=int(bytes_accessed)),
    )(x3, w1f, t1, w2f, t2, wcf, bcf)

    return logits_pad[:B, :num_classes]


# --------------------------- reference (pure JAX, f32) -------------------------
def reference(x, p):
    h = jnp.maximum(x, 0.0)
    pooled = lax.reduce_window(h, 0.0, lax.add, (1, 1, POOL_K, POOL_K),
                               (1, 1, POOL_S, POOL_S), "VALID") / float(POOL_K * POOL_K)
    y = lax.conv_general_dilated(pooled, p["w1"], (1, 1), "VALID",
                                 dimension_numbers=("NCHW", "OIHW", "NCHW"))
    y = (y - p["m1"][None, :, None, None]) / jnp.sqrt(p["v1"][None, :, None, None] + EPS)
    y = y * p["g1"][None, :, None, None] + p["b1"][None, :, None, None]
    y = jnp.maximum(y, 0.0)
    y = lax.conv_general_dilated(y, p["w2"], (1, 1), "VALID",
                                 dimension_numbers=("NCHW", "OIHW", "NCHW"))
    y = (y - p["m2"][None, :, None, None]) / jnp.sqrt(p["v2"][None, :, None, None] + EPS)
    y = y * p["g2"][None, :, None, None] + p["b2"][None, :, None, None]
    y = jnp.maximum(y, 0.0)
    y = y.reshape(x.shape[0], -1)
    return y @ p["wc"].T + p["bc"]


def init_params(key, C, num_classes):
    ks = jax.random.split(key, 12)
    p = {}
    p["w1"] = 0.1 * jax.random.normal(ks[0], (C_MID, C, 1, 1), jnp.float32)
    p["g1"] = 1.0 + 0.1 * jax.random.normal(ks[1], (C_MID,), jnp.float32)
    p["b1"] = 0.1 * jax.random.normal(ks[2], (C_MID,), jnp.float32)
    p["m1"] = 0.1 * jax.random.normal(ks[3], (C_MID,), jnp.float32)
    p["v1"] = jax.random.uniform(ks[4], (C_MID,), jnp.float32, 0.5, 1.5)
    p["w2"] = 0.05 * jax.random.normal(ks[5], (C_OUT, C_MID, 2, 2), jnp.float32)
    p["g2"] = 1.0 + 0.1 * jax.random.normal(ks[6], (C_OUT,), jnp.float32)
    p["b2"] = 0.1 * jax.random.normal(ks[7], (C_OUT,), jnp.float32)
    p["m2"] = 0.1 * jax.random.normal(ks[8], (C_OUT,), jnp.float32)
    p["v2"] = jax.random.uniform(ks[9], (C_OUT,), jnp.float32, 0.5, 1.5)
    p["wc"] = 0.05 * jax.random.normal(ks[10], (num_classes, C_OUT), jnp.float32)
    p["bc"] = 0.1 * jax.random.normal(ks[11], (num_classes,), jnp.float32)
    return p


if __name__ == "__main__":
    # 7x7 feature map: the spatial size at which the DARTS ImageNet aux head is
    # actually applied (5x5/stride-2 pooling -> 2x2 -> 2x2 conv -> 1x1 -> 768).
    B, C, H, W, num_classes = 2, 4, 7, 7, 10
    key = jax.random.PRNGKey(0)
    kx, kp = jax.random.split(key)
    x = jax.random.normal(kx, (B, C, H, W), jnp.float32)
    params = init_params(kp, C, num_classes)

    logits = jax.block_until_ready(auxiliary_head_imagenet(x, params))
    ref = reference(x, params)
    assert logits.shape == (B, num_classes)
    np.testing.assert_allclose(np.asarray(logits), np.asarray(ref),
                               rtol=3e-2, atol=3e-2)
    print("KERNEL_OK")
</pallas_src>

<mosaic_0001>
module attributes {stable_mosaic.version = 11 : i64} {
  func.func @kernel(%arg0: i32, %arg1: memref<49x2x128xbf16, #tpu.memory_space<vmem>>, %arg2: memref<128x128xbf16, #tpu.memory_space<vmem>>, %arg3: memref<1x128xf32, #tpu.memory_space<vmem>>, %arg4: memref<4x128x768xbf16, #tpu.memory_space<vmem>>, %arg5: memref<1x768xf32, #tpu.memory_space<vmem>>, %arg6: memref<768x128xbf16, #tpu.memory_space<vmem>>, %arg7: memref<1x128xf32, #tpu.memory_space<vmem>>, %arg8: memref<2x128xf32, #tpu.memory_space<vmem>>) attributes {dimension_semantics = [#tpu.dimension_semantics<parallel>], iteration_bounds = array<i64: 1>, scalar_prefetch = 0 : i64, scratch_operands = 0 : i64, tpu.core_type = #tpu.core_type<tc>, window_params = [{transform_indices = @transform_0, window_bounds = array<i64: 49, 2, 128>}, {pipeline_mode = #tpu.pipeline_mode<synchronous>, transform_indices = @transform_1, window_bounds = array<i64: 128, 128>}, {pipeline_mode = #tpu.pipeline_mode<synchronous>, transform_indices = @transform_2, window_bounds = array<i64: 1, 128>}, {pipeline_mode = #tpu.pipeline_mode<synchronous>, transform_indices = @transform_3, window_bounds = array<i64: 4, 128, 768>}, {pipeline_mode = #tpu.pipeline_mode<synchronous>, transform_indices = @transform_4, window_bounds = array<i64: 1, 768>}, {pipeline_mode = #tpu.pipeline_mode<synchronous>, transform_indices = @transform_5, window_bounds = array<i64: 768, 128>}, {pipeline_mode = #tpu.pipeline_mode<synchronous>, transform_indices = @transform_6, window_bounds = array<i64: 1, 128>}, {transform_indices = @transform_7, window_bounds = array<i64: 2, 128>}]} {
    %c0 = arith.constant 0 : index
    %c0_0 = arith.constant 0 : index
    %c0_1 = arith.constant 0 : index
    %0 = vector.load %arg1[%c0, %c0_0, %c0_1] : memref<49x2x128xbf16, #tpu.memory_space<vmem>>, vector<49x2x128xbf16>
    %1 = arith.extf %0 : vector<49x2x128xbf16> to vector<49x2x128xf32>
    %cst = arith.constant 0.000000e+00 : f32
    %2 = vector.broadcast %cst : f32 to vector<49x2x128xf32>
    %3 = arith.maximumf %1, %2 : vector<49x2x128xf32>
    %c0_2 = arith.constant 0 : index
    %c0_3 = arith.constant 0 : index
    %4 = vector.load %arg3[%c0_2, %c0_3] : memref<1x128xf32, #tpu.memory_space<vmem>>, vector<1x128xf32>
    %c0_4 = arith.constant 0 : index
    %c0_5 = arith.constant 0 : index
    %5 = vector.load %arg5[%c0_4, %c0_5] : memref<1x768xf32, #tpu.memory_space<vmem>>, vector<1x768xf32>
    %cst_6 = arith.constant 0.000000e+00 : f32
    %6 = vector.broadcast %cst_6 : f32 to vector<2x768xf32>
    %cst_7 = arith.constant 0.000000e+00 : f32
    %7 = vector.broadcast %cst_7 : f32 to vector<2x128xf32>
    %8 = vector.extract_strided_slice %3 {offsets = [0, 0, 0], sizes = [5, 2, 128], strides = [1, 1, 1]} : vector<49x2x128xf32> to vector<5x2x128xf32>
    %cst_8 = arith.constant dense<0.000000e+00> : vector<2x128xf32>
    %9 = vector.multi_reduction <add>, %8, %cst_8 [0] : vector<5x2x128xf32> to vector<2x128xf32>
    %10 = arith.addf %7, %9 : vector<2x128xf32>
    %11 = vector.extract_strided_slice %3 {offsets = [7, 0, 0], sizes = [5, 2, 128], strides = [1, 1, 1]} : vector<49x2x128xf32> to vector<5x2x128xf32>
    %cst_9 = arith.constant dense<0.000000e+00> : vector<2x128xf32>
    %12 = vector.multi_reduction <add>, %11, %cst_9 [0] : vector<5x2x128xf32> to vector<2x128xf32>
    %13 = arith.addf %10, %12 : vector<2x128xf32>
    %14 = vector.extract_strided_slice %3 {offsets = [14, 0, 0], sizes = [5, 2, 128], strides = [1, 1, 1]} : vector<49x2x128xf32> to vector<5x2x128xf32>
    %cst_10 = arith.constant dense<0.000000e+00> : vector<2x128xf32>
    %15 = vector.multi_reduction <add>, %14, %cst_10 [0] : vector<5x2x128xf32> to vector<2x128xf32>
    %16 = arith.addf %13, %15 : vector<2x128xf32>
    %17 = vector.extract_strided_slice %3 {offsets = [21, 0, 0], sizes = [5, 2, 128], strides = [1, 1, 1]} : vector<49x2x128xf32> to vector<5x2x128xf32>
    %cst_11 = arith.constant dense<0.000000e+00> : vector<2x128xf32>
    %18 = vector.multi_reduction <add>, %17, %cst_11 [0] : vector<5x2x128xf32> to vector<2x128xf32>
    %19 = arith.addf %16, %18 : vector<2x128xf32>
    %20 = vector.extract_strided_slice %3 {offsets = [28, 0, 0], sizes = [5, 2, 128], strides = [1, 1, 1]} : vector<49x2x128xf32> to vector<5x2x128xf32>
    %cst_12 = arith.constant dense<0.000000e+00> : vector<2x128xf32>
    %21 = vector.multi_reduction <add>, %20, %cst_12 [0] : vector<5x2x128xf32> to vector<2x128xf32>
    %22 = arith.addf %19, %21 : vector<2x128xf32>
    %cst_13 = arith.constant 4.000000e-02 : f32
    %23 = vector.broadcast %cst_13 : f32 to vector<2x128xf32>
    %24 = arith.mulf %22, %23 : vector<2x128xf32>
    %25 = arith.truncf %24 : vector<2x128xf32> to vector<2x128xbf16>
    %c0_14 = arith.constant 0 : index
    %c0_15 = arith.constant 0 : index
    %26 = vector.load %arg2[%c0_14, %c0_15] : memref<128x128xbf16, #tpu.memory_space<vmem>>, vector<128x128xbf16>
    %cst_16 = arith.constant dense<0.000000e+00> : vector<2x128xf32>
    %27 = tpu.matmul %25, %26, %cst_16 {dimension_numbers = #tpu.dot_dimension_numbers<[1], [0], [0], [1], [0, 0, 1, 1], [], []>} : vector<2x128xbf16>, vector<128x128xbf16>, vector<2x128xf32> -> vector<2x128xf32>
    %28 = vector.broadcast %4 : vector<1x128xf32> to vector<2x128xf32>
    %29 = arith.addf %27, %28 : vector<2x128xf32>
    %cst_17 = arith.constant 0.000000e+00 : f32
    %30 = vector.broadcast %cst_17 : f32 to vector<2x128xf32>
    %31 = arith.maximumf %29, %30 : vector<2x128xf32>
    %32 = arith.truncf %31 : vector<2x128xf32> to vector<2x128xbf16>
    %c0_18 = arith.constant 0 : index
    %c0_19 = arith.constant 0 : index
    %c0_20 = arith.constant 0 : index
    %33 = vector.load %arg4[%c0_18, %c0_19, %c0_20] : memref<4x128x768xbf16, #tpu.memory_space<vmem>>, vector<1x128x768xbf16>
    %34 = vector.shape_cast %33 : vector<1x128x768xbf16> to vector<128x768xbf16>
    %cst_21 = arith.constant dense<0.000000e+00> : vector<2x768xf32>
    %35 = tpu.matmul %32, %34, %cst_21 {dimension_numbers = #tpu.dot_dimension_numbers<[1], [0], [0], [1], [0, 0, 1, 1], [], []>} : vector<2x128xbf16>, vector<128x768xbf16>, vector<2x768xf32> -> vector<2x768xf32>
    %36 = arith.addf %6, %35 : vector<2x768xf32>
    %cst_22 = arith.constant 0.000000e+00 : f32
    %37 = vector.broadcast %cst_22 : f32 to vector<2x128xf32>
    %38 = vector.extract_strided_slice %3 {offsets = [2, 0, 0], sizes = [5, 2, 128], strides = [1, 1, 1]} : vector<49x2x128xf32> to vector<5x2x128xf32>
    %cst_23 = arith.constant dense<0.000000e+00> : vector<2x128xf32>
    %39 = vector.multi_reduction <add>, %38, %cst_23 [0] : vector<5x2x128xf32> to vector<2x128xf32>
    %40 = arith.addf %37, %39 : vector<2x128xf32>
    %41 = vector.extract_strided_slice %3 {offsets = [9, 0, 0], sizes = [5, 2, 128], strides = [1, 1, 1]} : vector<49x2x128xf32> to vector<5x2x128xf32>
    %cst_24 = arith.constant dense<0.000000e+00> : vector<2x128xf32>
    %42 = vector.multi_reduction <add>, %41, %cst_24 [0] : vector<5x2x128xf32> to vector<2x128xf32>
    %43 = arith.addf %40, %42 : vector<2x128xf32>
    %44 = vector.extract_strided_slice %3 {offsets = [16, 0, 0], sizes = [5, 2, 128], strides = [1, 1, 1]} : vector<49x2x128xf32> to vector<5x2x128xf32>
    %cst_25 = arith.constant dense<0.000000e+00> : vector<2x128xf32>
    %45 = vector.multi_reduction <add>, %44, %cst_25 [0] : vector<5x2x128xf32> to vector<2x128xf32>
    %46 = arith.addf %43, %45 : vector<2x128xf32>
    %47 = vector.extract_strided_slice %3 {offsets = [23, 0, 0], sizes = [5, 2, 128], strides = [1, 1, 1]} : vector<49x2x128xf32> to vector<5x2x128xf32>
    %cst_26 = arith.constant dense<0.000000e+00> : vector<2x128xf32>
    %48 = vector.multi_reduction <add>, %47, %cst_26 [0] : vector<5x2x128xf32> to vector<2x128xf32>
    %49 = arith.addf %46, %48 : vector<2x128xf32>
    %50 = vector.extract_strided_slice %3 {offsets = [30, 0, 0], sizes = [5, 2, 128], strides = [1, 1, 1]} : vector<49x2x128xf32> to vector<5x2x128xf32>
    %cst_27 = arith.constant dense<0.000000e+00> : vector<2x128xf32>
    %51 = vector.multi_reduction <add>, %50, %cst_27 [0] : vector<5x2x128xf32> to vector<2x128xf32>
    %52 = arith.addf %49, %51 : vector<2x128xf32>
    %cst_28 = arith.constant 4.000000e-02 : f32
    %53 = vector.broadcast %cst_28 : f32 to vector<2x128xf32>
    %54 = arith.mulf %52, %53 : vector<2x128xf32>
    %55 = arith.truncf %54 : vector<2x128xf32> to vector<2x128xbf16>
    %c0_29 = arith.constant 0 : index
    %c0_30 = arith.constant 0 : index
    %56 = vector.load %arg2[%c0_29, %c0_30] : memref<128x128xbf16, #tpu.memory_space<vmem>>, vector<128x128xbf16>
    %cst_31 = arith.constant dense<0.000000e+00> : vector<2x128xf32>
    %57 = tpu.matmul %55, %56, %cst_31 {dimension_numbers = #tpu.dot_dimension_numbers<[1], [0], [0], [1], [0, 0, 1, 1], [], []>} : vector<2x128xbf16>, vector<128x128xbf16>, vector<2x128xf32> -> vector<2x128xf32>
    %58 = vector.broadcast %4 : vector<1x128xf32> to vector<2x128xf32>
    %59 = arith.addf %57, %58 : vector<2x128xf32>
    %cst_32 = arith.constant 0.000000e+00 : f32
    %60 = vector.broadcast %cst_32 : f32 to vector<2x128xf32>
    %61 = arith.maximumf %59, %60 : vector<2x128xf32>
    %62 = arith.truncf %61 : vector<2x128xf32> to vector<2x128xbf16>
    %c1 = arith.constant 1 : index
    %c0_33 = arith.constant 0 : index
    %c0_34 = arith.constant 0 : index
    %63 = vector.load %arg4[%c1, %c0_33, %c0_34] : memref<4x128x768xbf16, #tpu.memory_space<vmem>>, vector<1x128x768xbf16>
    %64 = vector.shape_cast %63 : vector<1x128x768xbf16> to vector<128x768xbf16>
    %cst_35 = arith.constant dense<0.000000e+00> : vector<2x768xf32>
    %65 = tpu.matmul %62, %64, %cst_35 {dimension_numbers = #tpu.dot_dimension_numbers<[1], [0], [0], [1], [0, 0, 1, 1], [], []>} : vector<2x128xbf16>, vector<128x768xbf16>, vector<2x768xf32> -> vector<2x768xf32>
    %66 = arith.addf %36, %65 : vector<2x768xf32>
    %cst_36 = arith.constant 0.000000e+00 : f32
    %67 = vector.broadcast %cst_36 : f32 to vector<2x128xf32>
    %68 = vector.extract_strided_slice %3 {offsets = [14, 0, 0], sizes = [5, 2, 128], strides = [1, 1, 1]} : vector<49x2x128xf32> to vector<5x2x128xf32>
    %cst_37 = arith.constant dense<0.000000e+00> : vector<2x128xf32>
    %69 = vector.multi_reduction <add>, %68, %cst_37 [0] : vector<5x2x128xf32> to vector<2x128xf32>
    %70 = arith.addf %67, %69 : vector<2x128xf32>
    %71 = vector.extract_strided_slice %3 {offsets = [21, 0, 0], sizes = [5, 2, 128], strides = [1, 1, 1]} : vector<49x2x128xf32> to vector<5x2x128xf32>
    %cst_38 = arith.constant dense<0.000000e+00> : vector<2x128xf32>
    %72 = vector.multi_reduction <add>, %71, %cst_38 [0] : vector<5x2x128xf32> to vector<2x128xf32>
    %73 = arith.addf %70, %72 : vector<2x128xf32>
    %74 = vector.extract_strided_slice %3 {offsets = [28, 0, 0], sizes = [5, 2, 128], strides = [1, 1, 1]} : vector<49x2x128xf32> to vector<5x2x128xf32>
    %cst_39 = arith.constant dense<0.000000e+00> : vector<2x128xf32>
    %75 = vector.multi_reduction <add>, %74, %cst_39 [0] : vector<5x2x128xf32> to vector<2x128xf32>
    %76 = arith.addf %73, %75 : vector<2x128xf32>
    %77 = vector.extract_strided_slice %3 {offsets = [35, 0, 0], sizes = [5, 2, 128], strides = [1, 1, 1]} : vector<49x2x128xf32> to vector<5x2x128xf32>
    %cst_40 = arith.constant dense<0.000000e+00> : vector<2x128xf32>
    %78 = vector.multi_reduction <add>, %77, %cst_40 [0] : vector<5x2x128xf32> to vector<2x128xf32>
    %79 = arith.addf %76, %78 : vector<2x128xf32>
    %80 = vector.extract_strided_slice %3 {offsets = [42, 0, 0], sizes = [5, 2, 128], strides = [1, 1, 1]} : vector<49x2x128xf32> to vector<5x2x128xf32>
    %cst_41 = arith.constant dense<0.000000e+00> : vector<2x128xf32>
    %81 = vector.multi_reduction <add>, %80, %cst_41 [0] : vector<5x2x128xf32> to vector<2x128xf32>
    %82 = arith.addf %79, %81 : vector<2x128xf32>
    %cst_42 = arith.constant 4.000000e-02 : f32
    %83 = vector.broadcast %cst_42 : f32 to vector<2x128xf32>
    %84 = arith.mulf %82, %83 : vector<2x128xf32>
    %85 = arith.truncf %84 : vector<2x128xf32> to vector<2x128xbf16>
    %c0_43 = arith.constant 0 : index
    %c0_44 = arith.constant 0 : index
    %86 = vector.load %arg2[%c0_43, %c0_44] : memref<128x128xbf16, #tpu.memory_space<vmem>>, vector<128x128xbf16>
    %cst_45 = arith.constant dense<0.000000e+00> : vector<2x128xf32>
    %87 = tpu.matmul %85, %86, %cst_45 {dimension_numbers = #tpu.dot_dimension_numbers<[1], [0], [0], [1], [0, 0, 1, 1], [], []>} : vector<2x128xbf16>, vector<128x128xbf16>, vector<2x128xf32> -> vector<2x128xf32>
    %88 = vector.broadcast %4 : vector<1x128xf32> to vector<2x128xf32>
    %89 = arith.addf %87, %88 : vector<2x128xf32>
    %cst_46 = arith.constant 0.000000e+00 : f32
    %90 = vector.broadcast %cst_46 : f32 to vector<2x128xf32>
    %91 = arith.maximumf %89, %90 : vector<2x128xf32>
    %92 = arith.truncf %91 : vector<2x128xf32> to vector<2x128xbf16>
    %c2 = arith.constant 2 : index
    %c0_47 = arith.constant 0 : index
    %c0_48 = arith.constant 0 : index
    %93 = vector.load %arg4[%c2, %c0_47, %c0_48] : memref<4x128x768xbf16, #tpu.memory_space<vmem>>, vector<1x128x768xbf16>
    %94 = vector.shape_cast %93 : vector<1x128x768xbf16> to vector<128x768xbf16>
    %cst_49 = arith.constant dense<0.000000e+00> : vector<2x768xf32>
    %95 = tpu.matmul %92, %94, %cst_49 {dimension_numbers = #tpu.dot_dimension_numbers<[1], [0], [0], [1], [0, 0, 1, 1], [], []>} : vector<2x128xbf16>, vector<128x768xbf16>, vector<2x768xf32> -> vector<2x768xf32>
    %96 = arith.addf %66, %95 : vector<2x768xf32>
    %cst_50 = arith.constant 0.000000e+00 : f32
    %97 = vector.broadcast %cst_50 : f32 to vector<2x128xf32>
    %98 = vector.extract_strided_slice %3 {offsets = [16, 0, 0], sizes = [5, 2, 128], strides = [1, 1, 1]} : vector<49x2x128xf32> to vector<5x2x128xf32>
    %cst_51 = arith.constant dense<0.000000e+00> : vector<2x128xf32>
    %99 = vector.multi_reduction <add>, %98, %cst_51 [0] : vector<5x2x128xf32> to vector<2x128xf32>
    %100 = arith.addf %97, %99 : vector<2x128xf32>
    %101 = vector.extract_strided_slice %3 {offsets = [23, 0, 0], sizes = [5, 2, 128], strides = [1, 1, 1]} : vector<49x2x128xf32> to vector<5x2x128xf32>
    %cst_52 = arith.constant dense<0.000000e+00> : vector<2x128xf32>
    %102 = vector.multi_reduction <add>, %101, %cst_52 [0] : vector<5x2x128xf32> to vector<2x128xf32>
    %103 = arith.addf %100, %102 : vector<2x128xf32>
    %104 = vector.extract_strided_slice %3 {offsets = [30, 0, 0], sizes = [5, 2, 128], strides = [1, 1, 1]} : vector<49x2x128xf32> to vector<5x2x128xf32>
    %cst_53 = arith.constant dense<0.000000e+00> : vector<2x128xf32>
    %105 = vector.multi_reduction <add>, %104, %cst_53 [0] : vector<5x2x128xf32> to vector<2x128xf32>
    %106 = arith.addf %103, %105 : vector<2x128xf32>
    %107 = vector.extract_strided_slice %3 {offsets = [37, 0, 0], sizes = [5, 2, 128], strides = [1, 1, 1]} : vector<49x2x128xf32> to vector<5x2x128xf32>
    %cst_54 = arith.constant dense<0.000000e+00> : vector<2x128xf32>
    %108 = vector.multi_reduction <add>, %107, %cst_54 [0] : vector<5x2x128xf32> to vector<2x128xf32>
    %109 = arith.addf %106, %108 : vector<2x128xf32>
    %110 = vector.extract_strided_slice %3 {offsets = [44, 0, 0], sizes = [5, 2, 128], strides = [1, 1, 1]} : vector<49x2x128xf32> to vector<5x2x128xf32>
    %cst_55 = arith.constant dense<0.000000e+00> : vector<2x128xf32>
    %111 = vector.multi_reduction <add>, %110, %cst_55 [0] : vector<5x2x128xf32> to vector<2x128xf32>
    %112 = arith.addf %109, %111 : vector<2x128xf32>
    %cst_56 = arith.constant 4.000000e-02 : f32
    %113 = vector.broadcast %cst_56 : f32 to vector<2x128xf32>
    %114 = arith.mulf %112, %113 : vector<2x128xf32>
    %115 = arith.truncf %114 : vector<2x128xf32> to vector<2x128xbf16>
    %c0_57 = arith.constant 0 : index
    %c0_58 = arith.constant 0 : index
    %116 = vector.load %arg2[%c0_57, %c0_58] : memref<128x128xbf16, #tpu.memory_space<vmem>>, vector<128x128xbf16>
    %cst_59 = arith.constant dense<0.000000e+00> : vector<2x128xf32>
    %117 = tpu.matmul %115, %116, %cst_59 {dimension_numbers = #tpu.dot_dimension_numbers<[1], [0], [0], [1], [0, 0, 1, 1], [], []>} : vector<2x128xbf16>, vector<128x128xbf16>, vector<2x128xf32> -> vector<2x128xf32>
    %118 = vector.broadcast %4 : vector<1x128xf32> to vector<2x128xf32>
    %119 = arith.addf %117, %118 : vector<2x128xf32>
    %cst_60 = arith.constant 0.000000e+00 : f32
    %120 = vector.broadcast %cst_60 : f32 to vector<2x128xf32>
    %121 = arith.maximumf %119, %120 : vector<2x128xf32>
    %122 = arith.truncf %121 : vector<2x128xf32> to vector<2x128xbf16>
    %c3 = arith.constant 3 : index
    %c0_61 = arith.constant 0 : index
    %c0_62 = arith.constant 0 : index
    %123 = vector.load %arg4[%c3, %c0_61, %c0_62] : memref<4x128x768xbf16, #tpu.memory_space<vmem>>, vector<1x128x768xbf16>
    %124 = vector.shape_cast %123 : vector<1x128x768xbf16> to vector<128x768xbf16>
    %cst_63 = arith.constant dense<0.000000e+00> : vector<2x768xf32>
    %125 = tpu.matmul %122, %124, %cst_63 {dimension_numbers = #tpu.dot_dimension_numbers<[1], [0], [0], [1], [0, 0, 1, 1], [], []>} : vector<2x128xbf16>, vector<128x768xbf16>, vector<2x768xf32> -> vector<2x768xf32>
    %126 = arith.addf %96, %125 : vector<2x768xf32>
    %127 = vector.broadcast %5 : vector<1x768xf32> to vector<2x768xf32>
    %128 = arith.addf %126, %127 : vector<2x768xf32>
    %cst_64 = arith.constant 0.000000e+00 : f32
    %129 = vector.broadcast %cst_64 : f32 to vector<2x768xf32>
    %130 = arith.maximumf %128, %129 : vector<2x768xf32>
    %131 = arith.truncf %130 : vector<2x768xf32> to vector<2x768xbf16>
    %c0_65 = arith.constant 0 : index
    %c0_66 = arith.constant 0 : index
    %132 = vector.load %arg6[%c0_65, %c0_66] : memref<768x128xbf16, #tpu.memory_space<vmem>>, vector<768x128xbf16>
    %cst_67 = arith.constant dense<0.000000e+00> : vector<2x128xf32>
    %133 = tpu.matmul %131, %132, %cst_67 {dimension_numbers = #tpu.dot_dimension_numbers<[1], [0], [0], [1], [0, 0, 1, 1], [], []>} : vector<2x768xbf16>, vector<768x128xbf16>, vector<2x128xf32> -> vector<2x128xf32>
    %c0_68 = arith.constant 0 : index
    %c0_69 = arith.constant 0 : index
    %134 = vector.load %arg7[%c0_68, %c0_69] : memref<1x128xf32, #tpu.memory_space<vmem>>, vector<1x128xf32>
    %135 = vector.broadcast %134 : vector<1x128xf32> to vector<2x128xf32>
    %136 = arith.addf %133, %135 : vector<2x128xf32>
    %c0_70 = arith.constant 0 : index
    %c0_71 = arith.constant 0 : index
    %137 = vector.load %arg8[%c0_70, %c0_71] : memref<2x128xf32, #tpu.memory_space<vmem>>, vector<2x128xf32>
    tpu.vector_store %arg8[%c0_70, %c0_71], %136 {strides = array<i32>} : memref<2x128xf32, #tpu.memory_space<vmem>>, vector<2x128xf32>,
    return
  }
  func.func @transform_0(%arg0: i32) -> (i32, i32, i32) {
    %c0_i32 = arith.constant 0 : i32
    %c0_i32_0 = arith.constant 0 : i32
    %c0_i32_1 = arith.constant 0 : i32
    return %c0_i32, %arg0, %c0_i32_0 : i32, i32, i32
  }
  func.func @transform_1(%arg0: i32) -> (i32, i32) {
    %c0_i32 = arith.constant 0 : i32
    %c0_i32_0 = arith.constant 0 : i32
    %c0_i32_1 = arith.constant 0 : i32
    return %c0_i32, %c0_i32_0 : i32, i32
  }
  func.func @transform_2(%arg0: i32) -> (i32, i32) {
    %c0_i32 = arith.constant 0 : i32
    %c0_i32_0 = arith.constant 0 : i32
    %c0_i32_1 = arith.constant 0 : i32
    return %c0_i32, %c0_i32_0 : i32, i32
  }
  func.func @transform_3(%arg0: i32) -> (i32, i32, i32) {
    %c0_i32 = arith.constant 0 : i32
    %c0_i32_0 = arith.constant 0 : i32
    %c0_i32_1 = arith.constant 0 : i32
    %c0_i32_2 = arith.constant 0 : i32
    return %c0_i32, %c0_i32_0, %c0_i32_1 : i32, i32, i32
  }
  func.func @transform_4(%arg0: i32) -> (i32, i32) {
    %c0_i32 = arith.constant 0 : i32
    %c0_i32_0 = arith.constant 0 : i32
    %c0_i32_1 = arith.constant 0 : i32
    return %c0_i32, %c0_i32_0 : i32, i32
  }
  func.func @transform_5(%arg0: i32) -> (i32, i32) {
    %c0_i32 = arith.constant 0 : i32
    %c0_i32_0 = arith.constant 0 : i32
    %c0_i32_1 = arith.constant 0 : i32
    return %c0_i32, %c0_i32_0 : i32, i32
  }
  func.func @transform_6(%arg0: i32) -> (i32, i32) {
    %c0_i32 = arith.constant 0 : i32
    %c0_i32_0 = arith.constant 0 : i32
    %c0_i32_1 = arith.constant 0 : i32
    return %c0_i32, %c0_i32_0 : i32, i32
  }
  func.func @transform_7(%arg0: i32) -> (i32, i32) {
    %c0_i32 = arith.constant 0 : i32
    %c0_i32_0 = arith.constant 0 : i32
    return %arg0, %c0_i32 : i32, i32
  }
}

</mosaic_0001>

<llo_original>
// kernel: tpu_custom_call.1
$region0: #{tpu_custom_call.1}
  #allocation0 [shape = 'u32[]', space=smem, size = 0x4, offset = 0x4, fixed_abs, tag = 'smem constant byte address 0x4 - core index']
  #allocation1 [shape = 'u32[144,128]{1,0:T(1,128)}', space=vmem, size = 0x12000, scoped, tag = 'internal scratch']
  %s0 = inlined_call_operand.hbm [shape: bf16[49,2,128], index: 0, kind: input, shape index: {}]
  %s1 = inlined_call_operand.hbm [shape: bf16[128,128], index: 1, kind: input, shape index: {}]
  %s2 = inlined_call_operand.vmem [shape: f32[1,128], index: 2, kind: input, shape index: {}]
  %s3 = inlined_call_operand.hbm [shape: bf16[4,128,768], index: 3, kind: input, shape index: {}]
  %s4 = inlined_call_operand.vmem [shape: f32[1,768], index: 4, kind: input, shape index: {}]
  %s5 = inlined_call_operand.hbm [shape: bf16[768,128], index: 5, kind: input, shape index: {}]
  %s6 = inlined_call_operand.vmem [shape: f32[1,128], index: 6, kind: input, shape index: {}]
  %s7 = inlined_call_operand.hbm [shape: f32[2,128], index: 7, kind: output, shape index: {}]
  %s8 = sld [smem:[#allocation0]]
  $region54: #{tpu_custom_call.1} parent=0
    _
  %s10 = ssub.s32 1, %s8
  %s11 = scalar_select 0, %s10, %s8
  $region1: #{tpu_custom_call.1} parent=0
    #allocation2 [shape = 'u8[25088]{0}', space=vmem, size = 0x6400, scoped, tag = 'input window, operand 0, single buffered']
    #allocation3 [shape = 's32[1]{0}', space=sflag, size = 0x4, scoped, tag = 'scoped memory for tpu_custom_call.1']
    #allocation4 [shape = 's32[1]{0}', space=sflag, size = 0x4, scoped, tag = 'scoped memory for tpu_custom_call.1']
    #allocation5 [shape = 'u8[32768]{0}', space=vmem, size = 0x8000, scoped, tag = 'input window, operand 1, single buffered']
    #allocation6 [shape = 's32[1]{0}', space=sflag, size = 0x4, scoped, tag = 'scoped memory for tpu_custom_call.1']
    #allocation7 [shape = 'u8[786432]{0}', space=vmem, size = 0xc0000, scoped, tag = 'input window, operand 3, single buffered']
    #allocation8 [shape = 'u8[196608]{0}', space=vmem, size = 0x30000, scoped, tag = 'input window, operand 5, single buffered']
    #allocation9 [shape = 's32[1]{0}', space=sflag, size = 0x4, scoped, tag = 'scoped memory for tpu_custom_call.1']
    #allocation10 [shape = 'u8[1024]{0}', space=vmem, size = 0x400, scoped, tag = 'output window, operand 0, single buffered']
    %12 = vsyncpa [#allocation3], 0
    %13 = vsyncpa [#allocation6], 0
    %14 = vsyncpa [#allocation9], 0
    %15 = vsyncpa [#allocation4], 0
    // Predicated region
    $region2: #{tpu_custom_call.1} parent=1 // pred_check
      _
    $region3: #{tpu_custom_call.1} parent=1 // pred_check_branch
      %17 = sbr.rel (0) target = $region5
    $region4: #{tpu_custom_call.1} parent=1 // pred_region
      %s19 = ssub.s32 784, 784
      %20 = vsyncadd [#allocation3], %s19
      %s21 = sshll.u32 [#allocation2], 4
      %s22 = int_to_ptr.vmem [resolvable:$true] %s21
      %27 = dma.hbm_to_vmem [thread:$0]  %s0, 784, %s22, [#allocation3], 16, 16, 1
    $region5: #{tpu_custom_call.1} parent=1 // pred_fallthru
      _
    // Predicated region
    $region6: #{tpu_custom_call.1} parent=1 // pred_check
      _
    $region7: #{tpu_custom_call.1} parent=1 // pred_check_branch
      %29 = sbr.rel (0) target = $region9
    $region8: #{tpu_custom_call.1} parent=1 // pred_region
      %s31 = ssub.s32 1024, 1024
      %32 = vsyncadd [#allocation6], %s31
      %s33 = sshll.u32 [#allocation5], 4
      %s34 = int_to_ptr.vmem [resolvable:$true] %s33
      %39 = dma.hbm_to_vmem [thread:$0]  %s1, 1024, %s34, [#allocation6], 64, 64, 4
    $region9: #{tpu_custom_call.1} parent=1 // pred_fallthru
      _
    // Predicated region
    $region10: #{tpu_custom_call.1} parent=1 // pred_check
      _
    $region11: #{tpu_custom_call.1} parent=1 // pred_check_branch
      %41 = sbr.rel (0) target = $region13
    $region12: #{tpu_custom_call.1} parent=1 // pred_region
      _
    $region13: #{tpu_custom_call.1} parent=1 // pred_fallthru
      _
    // Predicated region
    $region14: #{tpu_custom_call.1} parent=1 // pred_check
      _
    $region15: #{tpu_custom_call.1} parent=1 // pred_check_branch
      %43 = sbr.rel (0) target = $region17
    $region16: #{tpu_custom_call.1} parent=1 // pred_region
      %s45 = ssub.s32 24576, 24576
      %46 = vsyncadd [#allocation6], %s45
      %s47 = sshll.u32 [#allocation7], 4
      %s48 = int_to_ptr.vmem [resolvable:$true] %s47
      %53 = dma.hbm_to_vmem [thread:$0]  %s3, 24576, %s48, [#allocation6], 384, 384, 24
    $region17: #{tpu_custom_call.1} parent=1 // pred_fallthru
      _
    // Predicated region
    $region18: #{tpu_custom_call.1} parent=1 // pred_check
      _
    $region19: #{tpu_custom_call.1} parent=1 // pred_check_branch
      %55 = sbr.rel (0) target = $region21
    $region20: #{tpu_custom_call.1} parent=1 // pred_region
      _
    $region21: #{tpu_custom_call.1} parent=1 // pred_fallthru
      _
    // Predicated region
    $region22: #{tpu_custom_call.1} parent=1 // pred_check
      _
    $region23: #{tpu_custom_call.1} parent=1 // pred_check_branch
      %57 = sbr.rel (0) target = $region25
    $region24: #{tpu_custom_call.1} parent=1 // pred_region
      %s59 = ssub.s32 6144, 6144
      %60 = vsyncadd [#allocation9], %s59
      %s61 = sshll.u32 [#allocation8], 4
      %s62 = int_to_ptr.vmem [resolvable:$true] %s61
      %67 = dma.hbm_to_vmem [thread:$0]  %s5, 6144, %s62, [#allocation9], 64, 64, 4
    $region25: #{tpu_custom_call.1} parent=1 // pred_fallthru
      _
    // Predicated region
    $region26: #{tpu_custom_call.1} parent=1 // pred_check
      _
    $region27: #{tpu_custom_call.1} parent=1 // pred_check_branch
      %69 = sbr.rel (0) target = $region29
    $region28: #{tpu_custom_call.1} parent=1 // pred_region
      _
    $region29: #{tpu_custom_call.1} parent=1 // pred_fallthru
      _
    // Predicated region
    $region30: #{tpu_custom_call.1} parent=1 // pred_check
      _
    $region31: #{tpu_custom_call.1} parent=1 // pred_check_branch
      %71 = sbr.rel (0) target = $region33
    $region32: #{tpu_custom_call.1} parent=1 // pred_region
      %72 = dma.done [#allocation3], 784
    $region33: #{tpu_custom_call.1} parent=1 // pred_fallthru
      _
    // Predicated region
    $region34: #{tpu_custom_call.1} parent=1 // pred_check
      _
    $region35: #{tpu_custom_call.1} parent=1 // pred_check_branch
      %74 = sbr.rel (0) target = $region37
    $region36: #{tpu_custom_call.1} parent=1 // pred_region
      %75 = dma.done [#allocation6], 1024
    $region37: #{tpu_custom_call.1} parent=1 // pred_fallthru
      _
    // Predicated region
    $region38: #{tpu_custom_call.1} parent=1 // pred_check
      _
    $region39: #{tpu_custom_call.1} parent=1 // pred_check_branch
      %77 = sbr.rel (0) target = $region41
    $region40: #{tpu_custom_call.1} parent=1 // pred_region
      %78 = dma.done [#allocation6], 24576
    $region41: #{tpu_custom_call.1} parent=1 // pred_fallthru
      _
    // Predicated region
    $region42: #{tpu_custom_call.1} parent=1 // pred_check
      _
    $region43: #{tpu_custom_call.1} parent=1 // pred_check_branch
      %80 = sbr.rel (0) target = $region45
    $region44: #{tpu_custom_call.1} parent=1 // pred_region
      %81 = dma.done [#allocation9], 6144
    $region45: #{tpu_custom_call.1} parent=1 // pred_fallthru
      _
    %v83 = vld [vmem:[#allocation2] sm:$0x1]
    %v84 = vld [vmem:[#allocation2 + $0x1] sm:$0x1]
    %v85 = vld [vmem:[#allocation2 + $0x2] sm:$0x1]
    %v86 = vld [vmem:[#allocation2 + $0x3] sm:$0x1]
    %v87 = vld [vmem:[#allocation2 + $0x4] sm:$0x1]
    %v88 = vld [vmem:[#allocation2 + $0x5] sm:$0x1]
    %v89 = vld [vmem:[#allocation2 + $0x6] sm:$0x1]
    %v90 = vld [vmem:[#allocation2 + $0x7] sm:$0x1]
    %v91 = vld [vmem:[#allocation2 + $0x8] sm:$0x1]
    %v92 = vld [vmem:[#allocation2 + $0x9] sm:$0x1]
    %v93 = vld [vmem:[#allocation2 + $0xa] sm:$0x1]
    %v94 = vld [vmem:[#allocation2 + $0xb] sm:$0x1]
    %v95 = vld [vmem:[#allocation2 + $0xc] sm:$0x1]
    %v96 = vld [vmem:[#allocation2 + $0xd] sm:$0x1]
    %v97 = vld [vmem:[#allocation2 + $0xe] sm:$0x1]
    %v98 = vld [vmem:[#allocation2 + $0xf] sm:$0x1]
    %v99 = vld [vmem:[#allocation2 + $0x10] sm:$0x1]
    %v100 = vld [vmem:[#allocation2 + $0x11] sm:$0x1]
    %v101 = vld [vmem:[#allocation2 + $0x12] sm:$0x1]
    %v102 = vld [vmem:[#allocation2 + $0x13] sm:$0x1]
    %v103 = vld [vmem:[#allocation2 + $0x14] sm:$0x1]
    %v104 = vld [vmem:[#allocation2 + $0x15] sm:$0x1]
    %v105 = vld [vmem:[#allocation2 + $0x16] sm:$0x1]
    %v106 = vld [vmem:[#allocation2 + $0x17] sm:$0x1]
    %v107 = vld [vmem:[#allocation2 + $0x18] sm:$0x1]
    %v108 = vld [vmem:[#allocation2 + $0x19] sm:$0x1]
    %v109 = vld [vmem:[#allocation2 + $0x1a] sm:$0x1]
    %v110 = vld [vmem:[#allocation2 + $0x1b] sm:$0x1]
    %v111 = vld [vmem:[#allocation2 + $0x1c] sm:$0x1]
    %v112 = vld [vmem:[#allocation2 + $0x1d] sm:$0x1]
    %v113 = vld [vmem:[#allocation2 + $0x1e] sm:$0x1]
    %v114 = vld [vmem:[#allocation2 + $0x1f] sm:$0x1]
    %v115 = vld [vmem:[#allocation2 + $0x20] sm:$0x1]
    %v116 = vld [vmem:[#allocation2 + $0x21] sm:$0x1]
    %v117 = vld [vmem:[#allocation2 + $0x22] sm:$0x1]
    %v118 = vld [vmem:[#allocation2 + $0x23] sm:$0x1]
    %v119 = vld [vmem:[#allocation2 + $0x24] sm:$0x1]
    %v120 = vld [vmem:[#allocation2 + $0x25] sm:$0x1]
    %v121 = vld [vmem:[#allocation2 + $0x26] sm:$0x1]
    %v122 = vld [vmem:[#allocation2 + $0x27] sm:$0x1]
    %v123 = vld [vmem:[#allocation2 + $0x28] sm:$0x1]
    %v124 = vld [vmem:[#allocation2 + $0x29] sm:$0x1]
    %v125 = vld [vmem:[#allocation2 + $0x2a] sm:$0x1]
    %v126 = vld [vmem:[#allocation2 + $0x2b] sm:$0x1]
    %v127 = vld [vmem:[#allocation2 + $0x2c] sm:$0x1]
    %v128 = vld [vmem:[#allocation2 + $0x2d] sm:$0x1]
    %v129 = vld [vmem:[#allocation2 + $0x2e] sm:$0x1]
    %v130 = vld [vmem:[#allocation2 + $0x2f] sm:$0x1]
    %v131 = vld [vmem:[#allocation2 + $0x30] sm:$0x1]
    %v132 = vunpack.c.l.bf16 %v83
    %v133 = vunpack.c.l.bf16 %v84
    %v134 = vunpack.c.l.bf16 %v85
    %v135 = vunpack.c.l.bf16 %v86
    %v136 = vunpack.c.l.bf16 %v87
    %v137 = vunpack.c.l.bf16 %v88
    %v138 = vunpack.c.l.bf16 %v89
    %v139 = vunpack.c.l.bf16 %v90
    %v140 = vunpack.c.l.bf16 %v91
    %v141 = vunpack.c.l.bf16 %v92
    %v142 = vunpack.c.l.bf16 %v93
    %v143 = vunpack.c.l.bf16 %v94
    %v144 = vunpack.c.l.bf16 %v95
    %v145 = vunpack.c.l.bf16 %v96
    %v146 = vunpack.c.l.bf16 %v97
    %v147 = vunpack.c.l.bf16 %v98
    %v148 = vunpack.c.l.bf16 %v99
    %v149 = vunpack.c.l.bf16 %v100
    %v150 = vunpack.c.l.bf16 %v101
    %v151 = vunpack.c.l.bf16 %v102
    %v152 = vunpack.c.l.bf16 %v103
    %v153 = vunpack.c.l.bf16 %v104
    %v154 = vunpack.c.l.bf16 %v105
    %v155 = vunpack.c.l.bf16 %v106
    %v156 = vunpack.c.l.bf16 %v107
    %v157 = vunpack.c.l.bf16 %v108
    %v158 = vunpack.c.l.bf16 %v109
    %v159 = vunpack.c.l.bf16 %v110
    %v160 = vunpack.c.l.bf16 %v111
    %v161 = vunpack.c.l.bf16 %v112
    %v162 = vunpack.c.l.bf16 %v113
    %v163 = vunpack.c.l.bf16 %v114
    %v164 = vunpack.c.l.bf16 %v115
    %v165 = vunpack.c.l.bf16 %v116
    %v166 = vunpack.c.l.bf16 %v117
    %v167 = vunpack.c.l.bf16 %v118
    %v168 = vunpack.c.l.bf16 %v119
    %v169 = vunpack.c.l.bf16 %v120
    %v170 = vunpack.c.l.bf16 %v121
    %v171 = vunpack.c.l.bf16 %v122
    %v172 = vunpack.c.l.bf16 %v123
    %v173 = vunpack.c.l.bf16 %v124
    %v174 = vunpack.c.l.bf16 %v125
    %v175 = vunpack.c.l.bf16 %v126
    %v176 = vunpack.c.l.bf16 %v127
    %v177 = vunpack.c.l.bf16 %v128
    %v178 = vunpack.c.l.bf16 %v129
    %v179 = vunpack.c.l.bf16 %v130
    %v180 = vunpack.c.l.bf16 %v131
    %v181 = vmax.f32 %v132, 0.0
    %v182 = vmax.f32 %v133, 0.0
    %v183 = vmax.f32 %v134, 0.0
    %v184 = vmax.f32 %v135, 0.0
    %v185 = vmax.f32 %v136, 0.0
    %v186 = vmax.f32 %v137, 0.0
    %v187 = vmax.f32 %v138, 0.0
    %v188 = vmax.f32 %v139, 0.0
    %v189 = vmax.f32 %v140, 0.0
    %v190 = vmax.f32 %v141, 0.0
    %v191 = vmax.f32 %v142, 0.0
    %v192 = vmax.f32 %v143, 0.0
    %v193 = vmax.f32 %v144, 0.0
    %v194 = vmax.f32 %v145, 0.0
    %v195 = vmax.f32 %v146, 0.0
    %v196 = vmax.f32 %v147, 0.0
    %v197 = vmax.f32 %v148, 0.0
    %v198 = vmax.f32 %v149, 0.0
    %v199 = vmax.f32 %v150, 0.0
    %v200 = vmax.f32 %v151, 0.0
    %v201 = vmax.f32 %v152, 0.0
    %v202 = vmax.f32 %v153, 0.0
    %v203 = vmax.f32 %v154, 0.0
    %v204 = vmax.f32 %v155, 0.0
    %v205 = vmax.f32 %v156, 0.0
    %v206 = vmax.f32 %v157, 0.0
    %v207 = vmax.f32 %v158, 0.0
    %v208 = vmax.f32 %v159, 0.0
    %v209 = vmax.f32 %v160, 0.0
    %v210 = vmax.f32 %v161, 0.0
    %v211 = vmax.f32 %v162, 0.0
    %v212 = vmax.f32 %v163, 0.0
    %v213 = vmax.f32 %v164, 0.0
    %v214 = vmax.f32 %v165, 0.0
    %v215 = vmax.f32 %v166, 0.0
    %v216 = vmax.f32 %v167, 0.0
    %v217 = vmax.f32 %v168, 0.0
    %v218 = vmax.f32 %v169, 0.0
    %v219 = vmax.f32 %v170, 0.0
    %v220 = vmax.f32 %v171, 0.0
    %v221 = vmax.f32 %v172, 0.0
    %v222 = vmax.f32 %v173, 0.0
    %v223 = vmax.f32 %v174, 0.0
    %v224 = vmax.f32 %v175, 0.0
    %v225 = vmax.f32 %v176, 0.0
    %v226 = vmax.f32 %v177, 0.0
    %v227 = vmax.f32 %v178, 0.0
    %v228 = vmax.f32 %v179, 0.0
    %v229 = vmax.f32 %v180, 0.0
    %v230 = vld [vmem:[%s2] sm:$0x1]
    %v231 = vld [vmem:[%s4] sm:$0x3f]
    %vm232 = vcmask 1041408
    %v233 = vsel %vm232, %v181, 0.0
    %v234 = vsel %vm232, %v182, 0.0
    %v235 = vadd.f32 %v233, %v234
    %v236 = vsel %vm232, %v183, 0.0
    %v237 = vadd.f32 %v235, %v236
    %v238 = vsel %vm232, %v184, 0.0
    %v239 = vadd.f32 %v237, %v238
    %v240 = vsel %vm232, %v185, 0.0
    %v241 = vadd.f32 %v239, %v240
    %v242 = vadd.f32 %v241, 0.0
    %v243 = vsel %vm232, %v188, 0.0
    %v244 = vsel %vm232, %v189, 0.0
    %v245 = vadd.f32 %v243, %v244
    %v246 = vsel %vm232, %v190, 0.0
    %v247 = vadd.f32 %v245, %v246
    %v248 = vsel %vm232, %v191, 0.0
    %v249 = vadd.f32 %v247, %v248
    %v250 = vsel %vm232, %v192, 0.0
    %v251 = vadd.f32 %v249, %v250
    %v252 = vadd.f32 %v242, %v251
    %v253 = vsel %vm232, %v195, 0.0
    %v254 = vsel %vm232, %v196, 0.0
    %v255 = vadd.f32 %v253, %v254
    %v256 = vsel %vm232, %v197, 0.0
    %v257 = vadd.f32 %v255, %v256
    %v258 = vsel %vm232, %v198, 0.0
    %v259 = vadd.f32 %v257, %v258
    %v260 = vsel %vm232, %v199, 0.0
    %v261 = vadd.f32 %v259, %v260
    %v262 = vadd.f32 %v252, %v261
    %v263 = vsel %vm232, %v202, 0.0
    %v264 = vsel %vm232, %v203, 0.0
    %v265 = vadd.f32 %v263, %v264
    %v266 = vsel %vm232, %v204, 0.0
    %v267 = vadd.f32 %v265, %v266
    %v268 = vsel %vm232, %v205, 0.0
    %v269 = vadd.f32 %v267, %v268
    %v270 = vsel %vm232, %v206, 0.0
    %v271 = vadd.f32 %v269, %v270
    %v272 = vadd.f32 %v262, %v271
    %v273 = vsel %vm232, %v209, 0.0
    %v274 = vsel %vm232, %v210, 0.0
    %v275 = vadd.f32 %v273, %v274
    %v276 = vsel %vm232, %v211, 0.0
    %v277 = vadd.f32 %v275, %v276
    %v278 = vsel %vm232, %v212, 0.0
    %v279 = vadd.f32 %v277, %v278
    %v280 = vsel %vm232, %v213, 0.0
    %v281 = vadd.f32 %v279, %v280
    %v282 = vadd.f32 %v272, %v281
    %v283 = vmul.f32 %v282, 0.04
    %v284 = vpack.c.bf16 %v283, %v283
    %v285 = vld [vmem:[#allocation5] sm:$0xf]
    %v286 = vld [vmem:[#allocation5 + $0x4] sm:$0xf]
    %v287 = vld [vmem:[#allocation5 + $0x8] sm:$0xf]
    %v288 = vld [vmem:[#allocation5 + $0xc] sm:$0xf]
    %v289 = vld [vmem:[#allocation5 + $0x10] sm:$0xf]
    %v290 = vld [vmem:[#allocation5 + $0x14] sm:$0xf]
    %v291 = vld [vmem:[#allocation5 + $0x18] sm:$0xf]
    %v292 = vld [vmem:[#allocation5 + $0x1c] sm:$0xf]
    %v293 = vld [vmem:[#allocation5 + $0x20] sm:$0xf]
    %v294 = vld [vmem:[#allocation5 + $0x24] sm:$0xf]
    %v295 = vld [vmem:[#allocation5 + $0x28] sm:$0xf]
    %v296 = vld [vmem:[#allocation5 + $0x2c] sm:$0xf]
    %v297 = vld [vmem:[#allocation5 + $0x30] sm:$0xf]
    %v298 = vld [vmem:[#allocation5 + $0x34] sm:$0xf]
    %v299 = vld [vmem:[#allocation5 + $0x38] sm:$0xf]
    %v300 = vld [vmem:[#allocation5 + $0x3c] sm:$0xf]
    %v302 = vlaneseq
    %v303 = vshrl.u32 %v302, 7
    %v304 = vsub.s32 0, %v303
    %v305 = vrot.slane %v230, %v304
    %v323 = vunpack.c.l.b16 %v285
    %v324 = vunpack.c.l.b16 %v286
    %v325 = vunpack.c.l.b16 %v287
    %v326 = vunpack.c.l.b16 %v288
    %v327 = vunpack.c.l.b16 %v289
    %v328 = vunpack.c.l.b16 %v290
    %v329 = vunpack.c.l.b16 %v291
    %v330 = vunpack.c.l.b16 %v292
    %v331 = vunpack.c.l.b16 %v293
    %v332 = vunpack.c.l.b16 %v294
    %v333 = vunpack.c.l.b16 %v295
    %v334 = vunpack.c.l.b16 %v296
    %v335 = vunpack.c.l.b16 %v297
    %v336 = vunpack.c.l.b16 %v298
    %v337 = vunpack.c.l.b16 %v299
    %v338 = vunpack.c.l.b16 %v300
    %v339 = vpack.c.b16 %v324, %v323
    %v340 = vpack.c.b16 %v326, %v325
    %v341 = vpack.c.b16 %v328, %v327
    %v342 = vpack.c.b16 %v330, %v329
    %v343 = vpack.c.b16 %v332, %v331
    %v344 = vpack.c.b16 %v334, %v333
    %v345 = vpack.c.b16 %v336, %v335
    %v346 = vpack.c.b16 %v338, %v337
    %355 = vmatprep.subr.bf16.mxu0 0
    %356 = vmatpush1.bf16.msra.mxu0 %v339
    %357 = vmatprep.subr.bf16.mxu0 0
    %358 = vmatpush1.bf16.msra.mxu0 %v340
    %359 = vmatprep.subr.bf16.mxu0 0
    %360 = vmatpush1.bf16.msra.mxu0 %v341
    %361 = vmatprep.subr.bf16.mxu0 0
    %362 = vmatpush1.bf16.msra.mxu0 %v342
    %363 = vmatprep.subr.bf16.mxu0 0
    %364 = vmatpush1.bf16.msra.mxu0 %v343
    %365 = vmatprep.subr.bf16.mxu0 0
    %366 = vmatpush1.bf16.msra.mxu0 %v344
    %367 = vmatprep.subr.bf16.mxu0 0
    %368 = vmatpush1.bf16.msra.mxu0 %v345
    %369 = vmatprep.subr.bf16.mxu0 0
    %370 = vmatpush1.bf16.msra.mxu0 %v346
    %371 = vmatprep.subr.bf16.mxu0 0
    %372 = vmatpush1.bf16.msra.mxu0 0
    %373 = vmatprep.subr.bf16.mxu0 0
    %374 = vmatpush1.bf16.msra.mxu0 0
    %375 = vmatprep.subr.bf16.mxu0 0
    %376 = vmatpush1.bf16.msra.mxu0 0
    %377 = vmatprep.subr.bf16.mxu0 0
    %378 = vmatpush1.bf16.msra.mxu0 0
    %379 = vmatprep.subr.bf16.mxu0 0
    %380 = vmatpush1.bf16.msra.mxu0 0
    %381 = vmatprep.subr.bf16.mxu0 0
    %382 = vmatpush1.bf16.msra.mxu0 0
    %383 = vmatprep.subr.bf16.mxu0 0
    %384 = vmatpush1.bf16.msra.mxu0 0
    %385 = vmatprep.subr.bf16.mxu0 0
    %386 = vmatpush1.bf16.msra.mxu0 0
    %387 = vmatprep.mubr.bf16.mxu0 0
    %388 = vmatmul.mubr.bf16.gmra.mrb[0].mxu0 %v284
    %v389 = vpop.f32.mrb[0].mxu0
    %v390 = vadd.f32 %v305, %v389
    %v391 = vpop.f32.mrb[0].mxu0
    %v392 = vpop.f32.mrb[0].mxu0
    %v393 = vpop.f32.mrb[0].mxu0
    %394 = vdwg.mxu0
    %v395 = vmax.f32 %v390, 0.0
    %v396 = vpack.c.bf16 %v395, %v395
    %v397 = vld [vmem:[#allocation7] sm:$0xff]
    %v398 = vld [vmem:[#allocation7 + $0x8] sm:$0xff]
    %v399 = vld [vmem:[#allocation7 + $0x10] sm:$0xff]
    %v400 = vld [vmem:[#allocation7 + $0x18] sm:$0xff]
    %v401 = vld [vmem:[#allocation7 + $0x20] sm:$0xff]
    %v402 = vld [vmem:[#allocation7 + $0x28] sm:$0xff]
    %v403 = vld [vmem:[#allocation7 + $0x30] sm:$0xff]
    %v404 = vld [vmem:[#allocation7 + $0x38] sm:$0xff]
    %v405 = vld [vmem:[#allocation7 + $0x40] sm:$0xff]
    %v406 = vld [vmem:[#allocation7 + $0x48] sm:$0xff]
    %v407 = vld [vmem:[#allocation7 + $0x50] sm:$0xff]
    %v408 = vld [vmem:[#allocation7 + $0x58] sm:$0xff]
    %v409 = vld [vmem:[#allocation7 + $0x60] sm:$0xff]
    %v410 = vld [vmem:[#allocation7 + $0x68] sm:$0xff]
    %v411 = vld [vmem:[#allocation7 + $0x70] sm:$0xff]
    %v412 = vld [vmem:[#allocation7 + $0x78] sm:$0xff]
    %v413 = vld [vmem:[#allocation7 + $0x80] sm:$0xff]
    %v414 = vld [vmem:[#allocation7 + $0x88] sm:$0xff]
    %v415 = vld [vmem:[#allocation7 + $0x90] sm:$0xff]
    %v416 = vld [vmem:[#allocation7 + $0x98] sm:$0xff]
    %v417 = vld [vmem:[#allocation7 + $0xa0] sm:$0xff]
    %v418 = vld [vmem:[#allocation7 + $0xa8] sm:$0xff]
    %v419 = vld [vmem:[#allocation7 + $0xb0] sm:$0xff]
    %v420 = vld [vmem:[#allocation7 + $0xb8] sm:$0xff]
    %v421 = vld [vmem:[#allocation7 + $0xc0] sm:$0xff]
    %v422 = vld [vmem:[#allocation7 + $0xc8] sm:$0xff]
    %v423 = vld [vmem:[#allocation7 + $0xd0] sm:$0xff]
    %v424 = vld [vmem:[#allocation7 + $0xd8] sm:$0xff]
    %v425 = vld [vmem:[#allocation7 + $0xe0] sm:$0xff]
    %v426 = vld [vmem:[#allocation7 + $0xe8] sm:$0xff]
    %v427 = vld [vmem:[#allocation7 + $0xf0] sm:$0xff]
    %v428 = vld [vmem:[#allocation7 + $0xf8] sm:$0xff]
    %v429 = vld [vmem:[#allocation7 + $0x100] sm:$0xff]
    %v430 = vld [vmem:[#allocation7 + $0x108] sm:$0xff]
    %v431 = vld [vmem:[#allocation7 + $0x110] sm:$0xff]
    %v432 = vld [vmem:[#allocation7 + $0x118] sm:$0xff]
    %v433 = vld [vmem:[#allocation7 + $0x120] sm:$0xff]
    %v434 = vld [vmem:[#allocation7 + $0x128] sm:$0xff]
    %v435 = vld [vmem:[#allocation7 + $0x130] sm:$0xff]
    %v436 = vld [vmem:[#allocation7 + $0x138] sm:$0xff]
    %v437 = vld [vmem:[#allocation7 + $0x140] sm:$0xff]
    %v438 = vld [vmem:[#allocation7 + $0x148] sm:$0xff]
    %v439 = vld [vmem:[#allocation7 + $0x150] sm:$0xff]
    %v440 = vld [vmem:[#allocation7 + $0x158] sm:$0xff]
    %v441 = vld [vmem:[#allocation7 + $0x160] sm:$0xff]
    %v442 = vld [vmem:[#allocation7 + $0x168] sm:$0xff]
    %v443 = vld [vmem:[#allocation7 + $0x170] sm:$0xff]
    %v444 = vld [vmem:[#allocation7 + $0x178] sm:$0xff]
    %v445 = vadd.f32 %v236, %v238
    %v446 = vadd.f32 %v445, %v240
    %v447 = vsel %vm232, %v186, 0.0
    %v448 = vadd.f32 %v446, %v447
    %v449 = vsel %vm232, %v187, 0.0
    %v450 = vadd.f32 %v448, %v449
    %v451 = vadd.f32 %v450, 0.0
    %v452 = vadd.f32 %v246, %v248
    %v453 = vadd.f32 %v452, %v250
    %v454 = vsel %vm232, %v193, 0.0
    %v455 = vadd.f32 %v453, %v454
    %v456 = vsel %vm232, %v194, 0.0
    %v457 = vadd.f32 %v455, %v456
    %v458 = vadd.f32 %v451, %v457
    %v459 = vadd.f32 %v256, %v258
    %v460 = vadd.f32 %v459, %v260
    %v461 = vsel %vm232, %v200, 0.0
    %v462 = vadd.f32 %v460, %v461
    %v463 = vsel %vm232, %v201, 0.0
    %v464 = vadd.f32 %v462, %v463
    %v465 = vadd.f32 %v458, %v464
    %v466 = vadd.f32 %v266, %v268
    %v467 = vadd.f32 %v466, %v270
    %v468 = vsel %vm232, %v207, 0.0
    %v469 = vadd.f32 %v467, %v468
    %v470 = vsel %vm232, %v208, 0.0
    %v471 = vadd.f32 %v469, %v470
    %v472 = vadd.f32 %v465, %v471
    %v473 = vadd.f32 %v276, %v278
    %v474 = vadd.f32 %v473, %v280
    %v475 = vsel %vm232, %v214, 0.0
    %v476 = vadd.f32 %v474, %v475
    %v477 = vsel %vm232, %v215, 0.0
    %v478 = vadd.f32 %v476, %v477
    %v479 = vadd.f32 %v472, %v478
    %v480 = vmul.f32 %v479, 0.04
    %v481 = vpack.c.bf16 %v480, %v480
    %482 = vmatprep.subr.bf16.mxu0 0
    %483 = vmatpush1.bf16.msra.mxu0 %v339
    %484 = vmatprep.subr.bf16.mxu0 0
    %485 = vmatpush1.bf16.msra.mxu0 %v340
    %486 = vmatprep.subr.bf16.mxu0 0
    %487 = vmatpush1.bf16.msra.mxu0 %v341
    %488 = vmatprep.subr.bf16.mxu0 0
    %489 = vmatpush1.bf16.msra.mxu0 %v342
    %490 = vmatprep.subr.bf16.mxu0 0
    %491 = vmatpush1.bf16.msra.mxu0 %v343
    %492 = vmatprep.subr.bf16.mxu0 0
    %493 = vmatpush1.bf16.msra.mxu0 %v344
    %494 = vmatprep.subr.bf16.mxu0 0
    %495 = vmatpush1.bf16.msra.mxu0 %v345
    %496 = vmatprep.subr.bf16.mxu0 0
    %497 = vmatpush1.bf16.msra.mxu0 %v346
    %498 = vmatprep.subr.bf16.mxu0 0
    %499 = vmatpush1.bf16.msra.mxu0 0
    %500 = vmatprep.subr.bf16.mxu0 0
    %501 = vmatpush1.bf16.msra.mxu0 0
    %502 = vmatprep.subr.bf16.mxu0 0
    %503 = vmatpush1.bf16.msra.mxu0 0
    %504 = vmatprep.subr.bf16.mxu0 0
    %505 = vmatpush1.bf16.msra.mxu0 0
    %506 = vmatprep.subr.bf16.mxu0 0
    %507 = vmatpush1.bf16.msra.mxu0 0
    %508 = vmatprep.subr.bf16.mxu0 0
    %509 = vmatpush1.bf16.msra.mxu0 0
    %510 = vmatprep.subr.bf16.mxu0 0
    %511 = vmatpush1.bf16.msra.mxu0 0
    %512 = vmatprep.subr.bf16.mxu0 0
    %513 = vmatpush1.bf16.msra.mxu0 0
    %514 = vmatprep.mubr.bf16.mxu0 0
    %515 = vmatmul.mubr.bf16.gmra.mrb[0].mxu0 %v481
    %v516 = vpop.f32.mrb[0].mxu0
    %v517 = vadd.f32 %v305, %v516
    %v518 = vpop.f32.mrb[0].mxu0
    %v519 = vpop.f32.mrb[0].mxu0
    %v520 = vpop.f32.mrb[0].mxu0
    %521 = vdwg.mxu0
    %v522 = vmax.f32 %v517, 0.0
    %v523 = vpack.c.bf16 %v522, %v522
    %s524 = scalar_lea.vmem [#allocation7], 384
    %v525 = vld [vmem:[%s524] sm:$0xff]
    %v526 = vld [vmem:[%s524 + $0x8] sm:$0xff]
    %v527 = vld [vmem:[%s524 + $0x10] sm:$0xff]
    %v528 = vld [vmem:[%s524 + $0x18] sm:$0xff]
    %v529 = vld [vmem:[%s524 + $0x20] sm:$0xff]
    %v530 = vld [vmem:[%s524 + $0x28] sm:$0xff]
    %v531 = vld [vmem:[%s524 + $0x30] sm:$0xff]
    %v532 = vld [vmem:[%s524 + $0x38] sm:$0xff]
    %v533 = vld [vmem:[%s524 + $0x40] sm:$0xff]
    %v534 = vld [vmem:[%s524 + $0x48] sm:$0xff]
    %v535 = vld [vmem:[%s524 + $0x50] sm:$0xff]
    %v536 = vld [vmem:[%s524 + $0x58] sm:$0xff]
    %v537 = vld [vmem:[%s524 + $0x60] sm:$0xff]
    %v538 = vld [vmem:[%s524 + $0x68] sm:$0xff]
    %v539 = vld [vmem:[%s524 + $0x70] sm:$0xff]
    %v540 = vld [vmem:[%s524 + $0x78] sm:$0xff]
    %v541 = vld [vmem:[%s524 + $0x80] sm:$0xff]
    %v542 = vld [vmem:[%s524 + $0x88] sm:$0xff]
    %v543 = vld [vmem:[%s524 + $0x90] sm:$0xff]
    %v544 = vld [vmem:[%s524 + $0x98] sm:$0xff]
    %v545 = vld [vmem:[%s524 + $0xa0] sm:$0xff]
    %v546 = vld [vmem:[%s524 + $0xa8] sm:$0xff]
    %v547 = vld [vmem:[%s524 + $0xb0] sm:$0xff]
    %v548 = vld [vmem:[%s524 + $0xb8] sm:$0xff]
    %v549 = vld [vmem:[%s524 + $0xc0] sm:$0xff]
    %v550 = vld [vmem:[%s524 + $0xc8] sm:$0xff]
    %v551 = vld [vmem:[%s524 + $0xd0] sm:$0xff]
    %v552 = vld [vmem:[%s524 + $0xd8] sm:$0xff]
    %v553 = vld [vmem:[%s524 + $0xe0] sm:$0xff]
    %v554 = vld [vmem:[%s524 + $0xe8] sm:$0xff]
    %v555 = vld [vmem:[%s524 + $0xf0] sm:$0xff]
    %v556 = vld [vmem:[%s524 + $0xf8] sm:$0xff]
    %v557 = vld [vmem:[%s524 + $0x100] sm:$0xff]
    %v558 = vld [vmem:[%s524 + $0x108] sm:$0xff]
    %v559 = vld [vmem:[%s524 + $0x110] sm:$0xff]
    %v560 = vld [vmem:[%s524 + $0x118] sm:$0xff]
    %v561 = vld [vmem:[%s524 + $0x120] sm:$0xff]
    %v562 = vld [vmem:[%s524 + $0x128] sm:$0xff]
    %v563 = vld [vmem:[%s524 + $0x130] sm:$0xff]
    %v564 = vld [vmem:[%s524 + $0x138] sm:$0xff]
    %v565 = vld [vmem:[%s524 + $0x140] sm:$0xff]
    %v566 = vld [vmem:[%s524 + $0x148] sm:$0xff]
    %v567 = vld [vmem:[%s524 + $0x150] sm:$0xff]
    %v568 = vld [vmem:[%s524 + $0x158] sm:$0xff]
    %v569 = vld [vmem:[%s524 + $0x160] sm:$0xff]
    %v570 = vld [vmem:[%s524 + $0x168] sm:$0xff]
    %v571 = vld [vmem:[%s524 + $0x170] sm:$0xff]
    %v572 = vld [vmem:[%s524 + $0x178] sm:$0xff]
    %v621 = vunpack.c.l.b16 %v525
    %v622 = vunpack.c.h.b16 %v525
    %v623 = vunpack.c.l.b16 %v526
    %v624 = vunpack.c.h.b16 %v526
    %v625 = vunpack.c.l.b16 %v527
    %v626 = vunpack.c.h.b16 %v527
    %v627 = vunpack.c.l.b16 %v528
    %v628 = vunpack.c.h.b16 %v528
    %v629 = vunpack.c.l.b16 %v529
    %v630 = vunpack.c.h.b16 %v529
    %v631 = vunpack.c.l.b16 %v530
    %v632 = vunpack.c.h.b16 %v530
    %v633 = vunpack.c.l.b16 %v531
    %v634 = vunpack.c.h.b16 %v531
    %v635 = vunpack.c.l.b16 %v532
    %v636 = vunpack.c.h.b16 %v532
    %v637 = vunpack.c.l.b16 %v533
    %v638 = vunpack.c.h.b16 %v533
    %v639 = vunpack.c.l.b16 %v534
    %v640 = vunpack.c.h.b16 %v534
    %v641 = vunpack.c.l.b16 %v535
    %v642 = vunpack.c.h.b16 %v535
    %v643 = vunpack.c.l.b16 %v536
    %v644 = vunpack.c.h.b16 %v536
    %v645 = vunpack.c.l.b16 %v537
    %v646 = vunpack.c.h.b16 %v537
    %v647 = vunpack.c.l.b16 %v538
    %v648 = vunpack.c.h.b16 %v538
    %v649 = vunpack.c.l.b16 %v539
    %v650 = vunpack.c.h.b16 %v539
    %v651 = vunpack.c.l.b16 %v540
    %v652 = vunpack.c.h.b16 %v540
    %v653 = vunpack.c.l.b16 %v541
    %v654 = vunpack.c.h.b16 %v541
    %v655 = vunpack.c.l.b16 %v542
    %v656 = vunpack.c.h.b16 %v542
    %v657 = vunpack.c.l.b16 %v543
    %v658 = vunpack.c.h.b16 %v543
    %v659 = vunpack.c.l.b16 %v544
    %v660 = vunpack.c.h.b16 %v544
    %v661 = vunpack.c.l.b16 %v545
    %v662 = vunpack.c.h.b16 %v545
    %v663 = vunpack.c.l.b16 %v546
    %v664 = vunpack.c.h.b16 %v546
    %v665 = vunpack.c.l.b16 %v547
    %v666 = vunpack.c.h.b16 %v547
    %v667 = vunpack.c.l.b16 %v548
    %v668 = vunpack.c.h.b16 %v548
    %v669 = vunpack.c.l.b16 %v549
    %v670 = vunpack.c.h.b16 %v549
    %v671 = vunpack.c.l.b16 %v550
    %v672 = vunpack.c.h.b16 %v550
    %v673 = vunpack.c.l.b16 %v551
    %v674 = vunpack.c.h.b16 %v551
    %v675 = vunpack.c.l.b16 %v552
    %v676 = vunpack.c.h.b16 %v552
    %v677 = vunpack.c.l.b16 %v553
    %v678 = vunpack.c.h.b16 %v553
    %v679 = vunpack.c.l.b16 %v554
    %v680 = vunpack.c.h.b16 %v554
    %v681 = vunpack.c.l.b16 %v555
    %v682 = vunpack.c.h.b16 %v555
    %v683 = vunpack.c.l.b16 %v556
    %v684 = vunpack.c.h.b16 %v556
    %v685 = vunpack.c.l.b16 %v557
    %v686 = vunpack.c.h.b16 %v557
    %v687 = vunpack.c.l.b16 %v558
    %v688 = vunpack.c.h.b16 %v558
    %v689 = vunpack.c.l.b16 %v559
    %v690 = vunpack.c.h.b16 %v559
    %v691 = vunpack.c.l.b16 %v560
    %v692 = vunpack.c.h.b16 %v560
    %v693 = vunpack.c.l.b16 %v561
    %v694 = vunpack.c.h.b16 %v561
    %v695 = vunpack.c.l.b16 %v562
    %v696 = vunpack.c.h.b16 %v562
    %v697 = vunpack.c.l.b16 %v563
    %v698 = vunpack.c.h.b16 %v563
    %v699 = vunpack.c.l.b16 %v564
    %v700 = vunpack.c.h.b16 %v564
    %v701 = vunpack.c.l.b16 %v565
    %v702 = vunpack.c.h.b16 %v565
    %v703 = vunpack.c.l.b16 %v566
    %v704 = vunpack.c.h.b16 %v566
    %v705 = vunpack.c.l.b16 %v567
    %v706 = vunpack.c.h.b16 %v567
    %v707 = vunpack.c.l.b16 %v568
    %v708 = vunpack.c.h.b16 %v568
    %v709 = vunpack.c.l.b16 %v569
    %v710 = vunpack.c.h.b16 %v569
    %v711 = vunpack.c.l.b16 %v570
    %v712 = vunpack.c.h.b16 %v570
    %v713 = vunpack.c.l.b16 %v571
    %v714 = vunpack.c.h.b16 %v571
    %v715 = vunpack.c.l.b16 %v572
    %v716 = vunpack.c.h.b16 %v572
    %v717 = vpack.c.b16 %v627, %v621
    %v718 = vpack.c.b16 %v628, %v622
    %v719 = vpack.c.b16 %v629, %v623
    %v720 = vpack.c.b16 %v630, %v624
    %v721 = vpack.c.b16 %v631, %v625
    %v722 = vpack.c.b16 %v632, %v626
    %v723 = vpack.c.b16 %v639, %v633
    %v724 = vpack.c.b16 %v640, %v634
    %v725 = vpack.c.b16 %v641, %v635
    %v726 = vpack.c.b16 %v642, %v636
    %v727 = vpack.c.b16 %v643, %v637
    %v728 = vpack.c.b16 %v644, %v638
    %v729 = vpack.c.b16 %v651, %v645
    %v730 = vpack.c.b16 %v652, %v646
    %v731 = vpack.c.b16 %v653, %v647
    %v732 = vpack.c.b16 %v654, %v648
    %v733 = vpack.c.b16 %v655, %v649
    %v734 = vpack.c.b16 %v656, %v650
    %v735 = vpack.c.b16 %v663, %v657
    %v736 = vpack.c.b16 %v664, %v658
    %v737 = vpack.c.b16 %v665, %v659
    %v738 = vpack.c.b16 %v666, %v660
    %v739 = vpack.c.b16 %v667, %v661
    %v740 = vpack.c.b16 %v668, %v662
    %v741 = vpack.c.b16 %v675, %v669
    %v742 = vpack.c.b16 %v676, %v670
    %v743 = vpack.c.b16 %v677, %v671
    %v744 = vpack.c.b16 %v678, %v672
    %v745 = vpack.c.b16 %v679, %v673
    %v746 = vpack.c.b16 %v680, %v674
    %v747 = vpack.c.b16 %v687, %v681
    %v748 = vpack.c.b16 %v688, %v682
    %v749 = vpack.c.b16 %v689, %v683
    %v750 = vpack.c.b16 %v690, %v684
    %v751 = vpack.c.b16 %v691, %v685
    %v752 = vpack.c.b16 %v692, %v686
    %v753 = vpack.c.b16 %v699, %v693
    %v754 = vpack.c.b16 %v700, %v694
    %v755 = vpack.c.b16 %v701, %v695
    %v756 = vpack.c.b16 %v702, %v696
    %v757 = vpack.c.b16 %v703, %v697
    %v758 = vpack.c.b16 %v704, %v698
    %v759 = vpack.c.b16 %v711, %v705
    %v760 = vpack.c.b16 %v712, %v706
    %v761 = vpack.c.b16 %v713, %v707
    %v762 = vpack.c.b16 %v714, %v708
    %v763 = vpack.c.b16 %v715, %v709
    %v764 = vpack.c.b16 %v716, %v710
    %813 = vmatprep.subr.bf16.mxu0 %v718
    %814 = vmatpush1.bf16.msra.mxu0 %v717
    %815 = vmatprep.subr.bf16.mxu0 %v724
    %816 = vmatpush1.bf16.msra.mxu0 %v723
    %817 = vmatprep.subr.bf16.mxu0 %v730
    %818 = vmatpush1.bf16.msra.mxu0 %v729
    %819 = vmatprep.subr.bf16.mxu0 %v736
    %820 = vmatpush1.bf16.msra.mxu0 %v735
    %821 = vmatprep.subr.bf16.mxu0 %v742
    %822 = vmatpush1.bf16.msra.mxu0 %v741
    %823 = vmatprep.subr.bf16.mxu0 %v748
    %824 = vmatpush1.bf16.msra.mxu0 %v747
    %825 = vmatprep.subr.bf16.mxu0 %v754
    %826 = vmatpush1.bf16.msra.mxu0 %v753
    %827 = vmatprep.subr.bf16.mxu0 %v760
    %828 = vmatpush1.bf16.msra.mxu0 %v759
    %829 = vmatprep.subr.bf16.mxu0 0
    %830 = vmatpush1.bf16.msra.mxu0 0
    %831 = vmatprep.subr.bf16.mxu0 0
    %832 = vmatpush1.bf16.msra.mxu0 0
    %833 = vmatprep.subr.bf16.mxu0 0
    %834 = vmatpush1.bf16.msra.mxu0 0
    %835 = vmatprep.subr.bf16.mxu0 0
    %836 = vmatpush1.bf16.msra.mxu0 0
    %837 = vmatprep.subr.bf16.mxu0 0
    %838 = vmatpush1.bf16.msra.mxu0 0
    %839 = vmatprep.subr.bf16.mxu0 0
    %840 = vmatpush1.bf16.msra.mxu0 0
    %841 = vmatprep.subr.bf16.mxu0 0
    %842 = vmatpush1.bf16.msra.mxu0 0
    %843 = vmatprep.subr.bf16.mxu0 0
    %844 = vmatpush1.bf16.msra.mxu0 0
    %845 = vmatprep.mubr.bf16.mxu0 0
    %846 = vmatmul.mubr.bf16.gmra.mrb[0].mxu0 %v523
    %v847 = vpop.f32.mrb[0].mxu0
    %v848 = vadd.f32 0.0, %v847
    %v849 = vpop.f32.mrb[0].mxu0
    %v850 = vadd.f32 0.0, %v849
    %v851 = vpop.f32.mrb[0].mxu0
    %v852 = vpop.f32.mrb[0].mxu0
    %853 = vdwg.mxu0
    %854 = vmatprep.subr.bf16.mxu0 %v720
    %855 = vmatpush1.bf16.msra.mxu0 %v719
    %856 = vmatprep.subr.bf16.mxu0 %v726
    %857 = vmatpush1.bf16.msra.mxu0 %v725
    %858 = vmatprep.subr.bf16.mxu0 %v732
    %859 = vmatpush1.bf16.msra.mxu0 %v731
    %860 = vmatprep.subr.bf16.mxu0 %v738
    %861 = vmatpush1.bf16.msra.mxu0 %v737
    %862 = vmatprep.subr.bf16.mxu0 %v744
    %863 = vmatpush1.bf16.msra.mxu0 %v743
    %864 = vmatprep.subr.bf16.mxu0 %v750
    %865 = vmatpush1.bf16.msra.mxu0 %v749
    %866 = vmatprep.subr.bf16.mxu0 %v756
    %867 = vmatpush1.bf16.msra.mxu0 %v755
    %868 = vmatprep.subr.bf16.mxu0 %v762
    %869 = vmatpush1.bf16.msra.mxu0 %v761
    %870 = vmatprep.subr.bf16.mxu0 0
    %871 = vmatpush1.bf16.msra.mxu0 0
    %872 = vmatprep.subr.bf16.mxu0 0
    %873 = vmatpush1.bf16.msra.mxu0 0
    %874 = vmatprep.subr.bf16.mxu0 0
    %875 = vmatpush1.bf16.msra.mxu0 0
    %876 = vmatprep.subr.bf16.mxu0 0
    %877 = vmatpush1.bf16.msra.mxu0 0
    %878 = vmatprep.subr.bf16.mxu0 0
    %879 = vmatpush1.bf16.msra.mxu0 0
    %880 = vmatprep.subr.bf16.mxu0 0
    %881 = vmatpush1.bf16.msra.mxu0 0
    %882 = vmatprep.subr.bf16.mxu0 0
    %883 = vmatpush1.bf16.msra.mxu0 0
    %884 = vmatprep.subr.bf16.mxu0 0
    %885 = vmatpush1.bf16.msra.mxu0 0
    %886 = vmatprep.mubr.bf16.mxu0 0
    %887 = vmatmul.mubr.bf16.gmra.mrb[0].mxu0 %v523
    %v888 = vpop.f32.mrb[0].mxu0
    %v889 = vadd.f32 0.0, %v888
    %v890 = vpop.f32.mrb[0].mxu0
    %v891 = vadd.f32 0.0, %v890
    %v892 = vpop.f32.mrb[0].mxu0
    %v893 = vpop.f32.mrb[0].mxu0
    %894 = vdwg.mxu0
    %895 = vmatprep.subr.bf16.mxu0 %v722
    %896 = vmatpush1.bf16.msra.mxu0 %v721
    %897 = vmatprep.subr.bf16.mxu0 %v728
    %898 = vmatpush1.bf16.msra.mxu0 %v727
    %899 = vmatprep.subr.bf16.mxu0 %v734
    %900 = vmatpush1.bf16.msra.mxu0 %v733
    %901 = vmatprep.subr.bf16.mxu0 %v740
    %902 = vmatpush1.bf16.msra.mxu0 %v739
    %903 = vmatprep.subr.bf16.mxu0 %v746
    %904 = vmatpush1.bf16.msra.mxu0 %v745
    %905 = vmatprep.subr.bf16.mxu0 %v752
    %906 = vmatpush1.bf16.msra.mxu0 %v751
    %907 = vmatprep.subr.bf16.mxu0 %v758
    %908 = vmatpush1.bf16.msra.mxu0 %v757
    %909 = vmatprep.subr.bf16.mxu0 %v764
    %910 = vmatpush1.bf16.msra.mxu0 %v763
    %911 = vmatprep.subr.bf16.mxu0 0
    %912 = vmatpush1.bf16.msra.mxu0 0
    %913 = vmatprep.subr.bf16.mxu0 0
    %914 = vmatpush1.bf16.msra.mxu0 0
    %915 = vmatprep.subr.bf16.mxu0 0
    %916 = vmatpush1.bf16.msra.mxu0 0
    %917 = vmatprep.subr.bf16.mxu0 0
    %918 = vmatpush1.bf16.msra.mxu0 0
    %919 = vmatprep.subr.bf16.mxu0 0
    %920 = vmatpush1.bf16.msra.mxu0 0
    %921 = vmatprep.subr.bf16.mxu0 0
    %922 = vmatpush1.bf16.msra.mxu0 0
    %923 = vmatprep.subr.bf16.mxu0 0
    %924 = vmatpush1.bf16.msra.mxu0 0
    %925 = vmatprep.subr.bf16.mxu0 0
    %926 = vmatpush1.bf16.msra.mxu0 0
    %927 = vmatprep.mubr.bf16.mxu0 0
    %928 = vmatmul.mubr.bf16.gmra.mrb[0].mxu0 %v523
    %v929 = vpop.f32.mrb[0].mxu0
    %v930 = vadd.f32 0.0, %v929
    %v931 = vpop.f32.mrb[0].mxu0
    %v932 = vadd.f32 0.0, %v931
    %v933 = vpop.f32.mrb[0].mxu0
    %v934 = vpop.f32.mrb[0].mxu0
    %935 = vdwg.mxu0
    %v984 = vunpack.c.l.b16 %v397
    %v985 = vunpack.c.h.b16 %v397
    %v986 = vunpack.c.l.b16 %v398
    %v987 = vunpack.c.h.b16 %v398
    %v988 = vunpack.c.l.b16 %v399
    %v989 = vunpack.c.h.b16 %v399
    %v990 = vunpack.c.l.b16 %v400
    %v991 = vunpack.c.h.b16 %v400
    %v992 = vunpack.c.l.b16 %v401
    %v993 = vunpack.c.h.b16 %v401
    %v994 = vunpack.c.l.b16 %v402
    %v995 = vunpack.c.h.b16 %v402
    %v996 = vunpack.c.l.b16 %v403
    %v997 = vunpack.c.h.b16 %v403
    %v998 = vunpack.c.l.b16 %v404
    %v999 = vunpack.c.h.b16 %v404
    %v1000 = vunpack.c.l.b16 %v405
    %v1001 = vunpack.c.h.b16 %v405
    %v1002 = vunpack.c.l.b16 %v406
    %v1003 = vunpack.c.h.b16 %v406
    %v1004 = vunpack.c.l.b16 %v407
    %v1005 = vunpack.c.h.b16 %v407
    %v1006 = vunpack.c.l.b16 %v408
    %v1007 = vunpack.c.h.b16 %v408
    %v1008 = vunpack.c.l.b16 %v409
    %v1009 = vunpack.c.h.b16 %v409
    %v1010 = vunpack.c.l.b16 %v410
    %v1011 = vunpack.c.h.b16 %v410
    %v1012 = vunpack.c.l.b16 %v411
    %v1013 = vunpack.c.h.b16 %v411
    %v1014 = vunpack.c.l.b16 %v412
    %v1015 = vunpack.c.h.b16 %v412
    %v1016 = vunpack.c.l.b16 %v413
    %v1017 = vunpack.c.h.b16 %v413
    %v1018 = vunpack.c.l.b16 %v414
    %v1019 = vunpack.c.h.b16 %v414
    %v1020 = vunpack.c.l.b16 %v415
    %v1021 = vunpack.c.h.b16 %v415
    %v1022 = vunpack.c.l.b16 %v416
    %v1023 = vunpack.c.h.b16 %v416
    %v1024 = vunpack.c.l.b16 %v417
    %v1025 = vunpack.c.h.b16 %v417
    %v1026 = vunpack.c.l.b16 %v418
    %v1027 = vunpack.c.h.b16 %v418
    %v1028 = vunpack.c.l.b16 %v419
    %v1029 = vunpack.c.h.b16 %v419
    %v1030 = vunpack.c.l.b16 %v420
    %v1031 = vunpack.c.h.b16 %v420
    %v1032 = vunpack.c.l.b16 %v421
    %v1033 = vunpack.c.h.b16 %v421
    %v1034 = vunpack.c.l.b16 %v422
    %v1035 = vunpack.c.h.b16 %v422
    %v1036 = vunpack.c.l.b16 %v423
    %v1037 = vunpack.c.h.b16 %v423
    %v1038 = vunpack.c.l.b16 %v424
    %v1039 = vunpack.c.h.b16 %v424
    %v1040 = vunpack.c.l.b16 %v425
    %v1041 = vunpack.c.h.b16 %v425
    %v1042 = vunpack.c.l.b16 %v426
    %v1043 = vunpack.c.h.b16 %v426
    %v1044 = vunpack.c.l.b16 %v427
    %v1045 = vunpack.c.h.b16 %v427
    %v1046 = vunpack.c.l.b16 %v428
    %v1047 = vunpack.c.h.b16 %v428
    %v1048 = vunpack.c.l.b16 %v429
    %v1049 = vunpack.c.h.b16 %v429
    %v1050 = vunpack.c.l.b16 %v430
    %v1051 = vunpack.c.h.b16 %v430
    %v1052 = vunpack.c.l.b16 %v431
    %v1053 = vunpack.c.h.b16 %v431
    %v1054 = vunpack.c.l.b16 %v432
    %v1055 = vunpack.c.h.b16 %v432
    %v1056 = vunpack.c.l.b16 %v433
    %v1057 = vunpack.c.h.b16 %v433
    %v1058 = vunpack.c.l.b16 %v434
    %v1059 = vunpack.c.h.b16 %v434
    %v1060 = vunpack.c.l.b16 %v435
    %v1061 = vunpack.c.h.b16 %v435
    %v1062 = vunpack.c.l.b16 %v436
    %v1063 = vunpack.c.h.b16 %v436
    %v1064 = vunpack.c.l.b16 %v437
    %v1065 = vunpack.c.h.b16 %v437
    %v1066 = vunpack.c.l.b16 %v438
    %v1067 = vunpack.c.h.b16 %v438
    %v1068 = vunpack.c.l.b16 %v439
    %v1069 = vunpack.c.h.b16 %v439
    %v1070 = vunpack.c.l.b16 %v440
    %v1071 = vunpack.c.h.b16 %v440
    %v1072 = vunpack.c.l.b16 %v441
    %v1073 = vunpack.c.h.b16 %v441
    %v1074 = vunpack.c.l.b16 %v442
    %v1075 = vunpack.c.h.b16 %v442
    %v1076 = vunpack.c.l.b16 %v443
    %v1077 = vunpack.c.h.b16 %v443
    %v1078 = vunpack.c.l.b16 %v444
    %v1079 = vunpack.c.h.b16 %v444
    %v1080 = vpack.c.b16 %v990, %v984
    %v1081 = vpack.c.b16 %v991, %v985
    %v1082 = vpack.c.b16 %v992, %v986
    %v1083 = vpack.c.b16 %v993, %v987
    %v1084 = vpack.c.b16 %v994, %v988
    %v1085 = vpack.c.b16 %v995, %v989
    %v1086 = vpack.c.b16 %v1002, %v996
    %v1087 = vpack.c.b16 %v1003, %v997
    %v1088 = vpack.c.b16 %v1004, %v998
    %v1089 = vpack.c.b16 %v1005, %v999
    %v1090 = vpack.c.b16 %v1006, %v1000
    %v1091 = vpack.c.b16 %v1007, %v1001
    %v1092 = vpack.c.b16 %v1014, %v1008
    %v1093 = vpack.c.b16 %v1015, %v1009
    %v1094 = vpack.c.b16 %v1016, %v1010
    %v1095 = vpack.c.b16 %v1017, %v1011
    %v1096 = vpack.c.b16 %v1018, %v1012
    %v1097 = vpack.c.b16 %v1019, %v1013
    %v1098 = vpack.c.b16 %v1026, %v1020
    %v1099 = vpack.c.b16 %v1027, %v1021
    %v1100 = vpack.c.b16 %v1028, %v1022
    %v1101 = vpack.c.b16 %v1029, %v1023
    %v1102 = vpack.c.b16 %v1030, %v1024
    %v1103 = vpack.c.b16 %v1031, %v1025
    %v1104 = vpack.c.b16 %v1038, %v1032
    %v1105 = vpack.c.b16 %v1039, %v1033
    %v1106 = vpack.c.b16 %v1040, %v1034
    %v1107 = vpack.c.b16 %v1041, %v1035
    %v1108 = vpack.c.b16 %v1042, %v1036
    %v1109 = vpack.c.b16 %v1043, %v1037
    %v1110 = vpack.c.b16 %v1050, %v1044
    %v1111 = vpack.c.b16 %v1051, %v1045
    %v1112 = vpack.c.b16 %v1052, %v1046
    %v1113 = vpack.c.b16 %v1053, %v1047
    %v1114 = vpack.c.b16 %v1054, %v1048
    %v1115 = vpack.c.b16 %v1055, %v1049
    %v1116 = vpack.c.b16 %v1062, %v1056
    %v1117 = vpack.c.b16 %v1063, %v1057
    %v1118 = vpack.c.b16 %v1064, %v1058
    %v1119 = vpack.c.b16 %v1065, %v1059
    %v1120 = vpack.c.b16 %v1066, %v1060
    %v1121 = vpack.c.b16 %v1067, %v1061
    %v1122 = vpack.c.b16 %v1074, %v1068
    %v1123 = vpack.c.b16 %v1075, %v1069
    %v1124 = vpack.c.b16 %v1076, %v1070
    %v1125 = vpack.c.b16 %v1077, %v1071
    %v1126 = vpack.c.b16 %v1078, %v1072
    %v1127 = vpack.c.b16 %v1079, %v1073
    %1176 = vmatprep.subr.bf16.mxu0 %v1081
    %1177 = vmatpush1.bf16.msra.mxu0 %v1080
    %1178 = vmatprep.subr.bf16.mxu0 %v1087
    %1179 = vmatpush1.bf16.msra.mxu0 %v1086
    %1180 = vmatprep.subr.bf16.mxu0 %v1093
    %1181 = vmatpush1.bf16.msra.mxu0 %v1092
    %1182 = vmatprep.subr.bf16.mxu0 %v1099
    %1183 = vmatpush1.bf16.msra.mxu0 %v1098
    %1184 = vmatprep.subr.bf16.mxu0 %v1105
    %1185 = vmatpush1.bf16.msra.mxu0 %v1104
    %1186 = vmatprep.subr.bf16.mxu0 %v1111
    %1187 = vmatpush1.bf16.msra.mxu0 %v1110
    %1188 = vmatprep.subr.bf16.mxu0 %v1117
    %1189 = vmatpush1.bf16.msra.mxu0 %v1116
    %1190 = vmatprep.subr.bf16.mxu0 %v1123
    %1191 = vmatpush1.bf16.msra.mxu0 %v1122
    %1192 = vmatprep.subr.bf16.mxu0 0
    %1193 = vmatpush1.bf16.msra.mxu0 0
    %1194 = vmatprep.subr.bf16.mxu0 0
    %1195 = vmatpush1.bf16.msra.mxu0 0
    %1196 = vmatprep.subr.bf16.mxu0 0
    %1197 = vmatpush1.bf16.msra.mxu0 0
    %1198 = vmatprep.subr.bf16.mxu0 0
    %1199 = vmatpush1.bf16.msra.mxu0 0
    %1200 = vmatprep.subr.bf16.mxu0 0
    %1201 = vmatpush1.bf16.msra.mxu0 0
    %1202 = vmatprep.subr.bf16.mxu0 0
    %1203 = vmatpush1.bf16.msra.mxu0 0
    %1204 = vmatprep.subr.bf16.mxu0 0
    %1205 = vmatpush1.bf16.msra.mxu0 0
    %1206 = vmatprep.subr.bf16.mxu0 0
    %1207 = vmatpush1.bf16.msra.mxu0 0
    %1208 = vmatprep.mubr.bf16.mxu0 0
    %1209 = vmatmul.mubr.bf16.gmra.mrb[0].mxu0 %v396
    %v1210 = vpop.f32.mrb[0].mxu0
    %v1211 = vadd.f32 %v848, %v1210
    %v1212 = vpop.f32.mrb[0].mxu0
    %v1213 = vadd.f32 %v850, %v1212
    %v1214 = vpop.f32.mrb[0].mxu0
    %v1215 = vpop.f32.mrb[0].mxu0
    %1216 = vdwg.mxu0
    %1217 = vmatprep.subr.bf16.mxu0 %v1083
    %1218 = vmatpush1.bf16.msra.mxu0 %v1082
    %1219 = vmatprep.subr.bf16.mxu0 %v1089
    %1220 = vmatpush1.bf16.msra.mxu0 %v1088
    %1221 = vmatprep.subr.bf16.mxu0 %v1095
    %1222 = vmatpush1.bf16.msra.mxu0 %v1094
    %1223 = vmatprep.subr.bf16.mxu0 %v1101
    %1224 = vmatpush1.bf16.msra.mxu0 %v1100
    %1225 = vmatprep.subr.bf16.mxu0 %v1107
    %1226 = vmatpush1.bf16.msra.mxu0 %v1106
    %1227 = vmatprep.subr.bf16.mxu0 %v1113
    %1228 = vmatpush1.bf16.msra.mxu0 %v1112
    %1229 = vmatprep.subr.bf16.mxu0 %v1119
    %1230 = vmatpush1.bf16.msra.mxu0 %v1118
    %1231 = vmatprep.subr.bf16.mxu0 %v1125
    %1232 = vmatpush1.bf16.msra.mxu0 %v1124
    %1233 = vmatprep.subr.bf16.mxu0 0
    %1234 = vmatpush1.bf16.msra.mxu0 0
    %1235 = vmatprep.subr.bf16.mxu0 0
    %1236 = vmatpush1.bf16.msra.mxu0 0
    %1237 = vmatprep.subr.bf16.mxu0 0
    %1238 = vmatpush1.bf16.msra.mxu0 0
    %1239 = vmatprep.subr.bf16.mxu0 0
    %1240 = vmatpush1.bf16.msra.mxu0 0
    %1241 = vmatprep.subr.bf16.mxu0 0
    %1242 = vmatpush1.bf16.msra.mxu0 0
    %1243 = vmatprep.subr.bf16.mxu0 0
    %1244 = vmatpush1.bf16.msra.mxu0 0
    %1245 = vmatprep.subr.bf16.mxu0 0
    %1246 = vmatpush1.bf16.msra.mxu0 0
    %1247 = vmatprep.subr.bf16.mxu0 0
    %1248 = vmatpush1.bf16.msra.mxu0 0
    %1249 = vmatprep.mubr.bf16.mxu0 0
    %1250 = vmatmul.mubr.bf16.gmra.mrb[0].mxu0 %v396
    %v1251 = vpop.f32.mrb[0].mxu0
    %v1252 = vadd.f32 %v889, %v1251
    %v1253 = vpop.f32.mrb[0].mxu0
    %v1254 = vadd.f32 %v891, %v1253
    %v1255 = vpop.f32.mrb[0].mxu0
    %v1256 = vpop.f32.mrb[0].mxu0
    %1257 = vdwg.mxu0
    %1258 = vmatprep.subr.bf16.mxu0 %v1085
    %1259 = vmatpush1.bf16.msra.mxu0 %v1084
    %1260 = vmatprep.subr.bf16.mxu0 %v1091
    %1261 = vmatpush1.bf16.msra.mxu0 %v1090
    %1262 = vmatprep.subr.bf16.mxu0 %v1097
    %1263 = vmatpush1.bf16.msra.mxu0 %v1096
    %1264 = vmatprep.subr.bf16.mxu0 %v1103
    %1265 = vmatpush1.bf16.msra.mxu0 %v1102
    %1266 = vmatprep.subr.bf16.mxu0 %v1109
    %1267 = vmatpush1.bf16.msra.mxu0 %v1108
    %1268 = vmatprep.subr.bf16.mxu0 %v1115
    %1269 = vmatpush1.bf16.msra.mxu0 %v1114
    %1270 = vmatprep.subr.bf16.mxu0 %v1121
    %1271 = vmatpush1.bf16.msra.mxu0 %v1120
    %1272 = vmatprep.subr.bf16.mxu0 %v1127
    %1273 = vmatpush1.bf16.msra.mxu0 %v1126
    %1274 = vmatprep.subr.bf16.mxu0 0
    %1275 = vmatpush1.bf16.msra.mxu0 0
    %1276 = vmatprep.subr.bf16.mxu0 0
    %1277 = vmatpush1.bf16.msra.mxu0 0
    %1278 = vmatprep.subr.bf16.mxu0 0
    %1279 = vmatpush1.bf16.msra.mxu0 0
    %1280 = vmatprep.subr.bf16.mxu0 0
    %1281 = vmatpush1.bf16.msra.mxu0 0
    %1282 = vmatprep.subr.bf16.mxu0 0
    %1283 = vmatpush1.bf16.msra.mxu0 0
    %1284 = vmatprep.subr.bf16.mxu0 0
    %1285 = vmatpush1.bf16.msra.mxu0 0
    %1286 = vmatprep.subr.bf16.mxu0 0
    %1287 = vmatpush1.bf16.msra.mxu0 0
    %1288 = vmatprep.subr.bf16.mxu0 0
    %1289 = vmatpush1.bf16.msra.mxu0 0
    %1290 = vmatprep.mubr.bf16.mxu0 0
    %1291 = vmatmul.mubr.bf16.gmra.mrb[0].mxu0 %v396
    %v1292 = vpop.f32.mrb[0].mxu0
    %v1293 = vadd.f32 %v930, %v1292
    %v1294 = vpop.f32.mrb[0].mxu0
    %v1295 = vadd.f32 %v932, %v1294
    %v1296 = vpop.f32.mrb[0].mxu0
    %v1297 = vpop.f32.mrb[0].mxu0
    %1298 = vdwg.mxu0
    %v1299 = vadd.f32 %v261, 0.0
    %v1300 = vadd.f32 %v1299, %v271
    %v1301 = vadd.f32 %v1300, %v281
    %v1302 = vsel %vm232, %v216, 0.0
    %v1303 = vsel %vm232, %v217, 0.0
    %v1304 = vadd.f32 %v1302, %v1303
    %v1305 = vsel %vm232, %v218, 0.0
    %v1306 = vadd.f32 %v1304, %v1305
    %v1307 = vsel %vm232, %v219, 0.0
    %v1308 = vadd.f32 %v1306, %v1307
    %v1309 = vsel %vm232, %v220, 0.0
    %v1310 = vadd.f32 %v1308, %v1309
    %v1311 = vadd.f32 %v1301, %v1310
    %v1312 = vsel %vm232, %v223, 0.0
    %v1313 = vsel %vm232, %v224, 0.0
    %v1314 = vadd.f32 %v1312, %v1313
    %v1315 = vsel %vm232, %v225, 0.0
    %v1316 = vadd.f32 %v1314, %v1315
    %v1317 = vsel %vm232, %v226, 0.0
    %v1318 = vadd.f32 %v1316, %v1317
    %v1319 = vsel %vm232, %v227, 0.0
    %v1320 = vadd.f32 %v1318, %v1319
    %v1321 = vadd.f32 %v1311, %v1320
    %v1322 = vmul.f32 %v1321, 0.04
    %v1323 = vpack.c.bf16 %v1322, %v1322
    %1324 = vmatprep.subr.bf16.mxu0 0
    %1325 = vmatpush1.bf16.msra.mxu0 %v339
    %1326 = vmatprep.subr.bf16.mxu0 0
    %1327 = vmatpush1.bf16.msra.mxu0 %v340
    %1328 = vmatprep.subr.bf16.mxu0 0
    %1329 = vmatpush1.bf16.msra.mxu0 %v341
    %1330 = vmatprep.subr.bf16.mxu0 0
    %1331 = vmatpush1.bf16.msra.mxu0 %v342
    %1332 = vmatprep.subr.bf16.mxu0 0
    %1333 = vmatpush1.bf16.msra.mxu0 %v343
    %1334 = vmatprep.subr.bf16.mxu0 0
    %1335 = vmatpush1.bf16.msra.mxu0 %v344
    %1336 = vmatprep.subr.bf16.mxu0 0
    %1337 = vmatpush1.bf16.msra.mxu0 %v345
    %1338 = vmatprep.subr.bf16.mxu0 0
    %1339 = vmatpush1.bf16.msra.mxu0 %v346
    %1340 = vmatprep.subr.bf16.mxu0 0
    %1341 = vmatpush1.bf16.msra.mxu0 0
    %1342 = vmatprep.subr.bf16.mxu0 0
    %1343 = vmatpush1.bf16.msra.mxu0 0
    %1344 = vmatprep.subr.bf16.mxu0 0
    %1345 = vmatpush1.bf16.msra.mxu0 0
    %1346 = vmatprep.subr.bf16.mxu0 0
    %1347 = vmatpush1.bf16.msra.mxu0 0
    %1348 = vmatprep.subr.bf16.mxu0 0
    %1349 = vmatpush1.bf16.msra.mxu0 0
    %1350 = vmatprep.subr.bf16.mxu0 0
    %1351 = vmatpush1.bf16.msra.mxu0 0
    %1352 = vmatprep.subr.bf16.mxu0 0
    %1353 = vmatpush1.bf16.msra.mxu0 0
    %1354 = vmatprep.subr.bf16.mxu0 0
    %1355 = vmatpush1.bf16.msra.mxu0 0
    %1356 = vmatprep.mubr.bf16.mxu0 0
    %1357 = vmatmul.mubr.bf16.gmra.mrb[0].mxu0 %v1323
    %v1358 = vpop.f32.mrb[0].mxu0
    %v1359 = vadd.f32 %v305, %v1358
    %v1360 = vpop.f32.mrb[0].mxu0
    %v1361 = vpop.f32.mrb[0].mxu0
    %v1362 = vpop.f32.mrb[0].mxu0
    %1363 = vdwg.mxu0
    %v1364 = vmax.f32 %v1359, 0.0
    %v1365 = vpack.c.bf16 %v1364, %v1364
    %s1366 = scalar_lea.vmem [#allocation7], 768
    %v1367 = vld [vmem:[%s1366] sm:$0xff]
    %v1368 = vld [vmem:[%s1366 + $0x8] sm:$0xff]
    %v1369 = vld [vmem:[%s1366 + $0x10] sm:$0xff]
    %v1370 = vld [vmem:[%s1366 + $0x18] sm:$0xff]
    %v1371 = vld [vmem:[%s1366 + $0x20] sm:$0xff]
    %v1372 = vld [vmem:[%s1366 + $0x28] sm:$0xff]
    %v1373 = vld [vmem:[%s1366 + $0x30] sm:$0xff]
    %v1374 = vld [vmem:[%s1366 + $0x38] sm:$0xff]
    %v1375 = vld [vmem:[%s1366 + $0x40] sm:$0xff]
    %v1376 = vld [vmem:[%s1366 + $0x48] sm:$0xff]
    %v1377 = vld [vmem:[%s1366 + $0x50] sm:$0xff]
    %v1378 = vld [vmem:[%s1366 + $0x58] sm:$0xff]
    %v1379 = vld [vmem:[%s1366 + $0x60] sm:$0xff]
    %v1380 = vld [vmem:[%s1366 + $0x68] sm:$0xff]
    %v1381 = vld [vmem:[%s1366 + $0x70] sm:$0xff]
    %v1382 = vld [vmem:[%s1366 + $0x78] sm:$0xff]
    %v1383 = vld [vmem:[%s1366 + $0x80] sm:$0xff]
    %v1384 = vld [vmem:[%s1366 + $0x88] sm:$0xff]
    %v1385 = vld [vmem:[%s1366 + $0x90] sm:$0xff]
    %v1386 = vld [vmem:[%s1366 + $0x98] sm:$0xff]
    %v1387 = vld [vmem:[%s1366 + $0xa0] sm:$0xff]
    %v1388 = vld [vmem:[%s1366 + $0xa8] sm:$0xff]
    %v1389 = vld [vmem:[%s1366 + $0xb0] sm:$0xff]
    %v1390 = vld [vmem:[%s1366 + $0xb8] sm:$0xff]
    %v1391 = vld [vmem:[%s1366 + $0xc0] sm:$0xff]
    %v1392 = vld [vmem:[%s1366 + $0xc8] sm:$0xff]
    %v1393 = vld [vmem:[%s1366 + $0xd0] sm:$0xff]
    %v1394 = vld [vmem:[%s1366 + $0xd8] sm:$0xff]
    %v1395 = vld [vmem:[%s1366 + $0xe0] sm:$0xff]
    %v1396 = vld [vmem:[%s1366 + $0xe8] sm:$0xff]
    %v1397 = vld [vmem:[%s1366 + $0xf0] sm:$0xff]
    %v1398 = vld [vmem:[%s1366 + $0xf8] sm:$0xff]
    %v1399 = vld [vmem:[%s1366 + $0x100] sm:$0xff]
    %v1400 = vld [vmem:[%s1366 + $0x108] sm:$0xff]
    %v1401 = vld [vmem:[%s1366 + $0x110] sm:$0xff]
    %v1402 = vld [vmem:[%s1366 + $0x118] sm:$0xff]
    %v1403 = vld [vmem:[%s1366 + $0x120] sm:$0xff]
    %v1404 = vld [vmem:[%s1366 + $0x128] sm:$0xff]
    %v1405 = vld [vmem:[%s1366 + $0x130] sm:$0xff]
    %v1406 = vld [vmem:[%s1366 + $0x138] sm:$0xff]
    %v1407 = vld [vmem:[%s1366 + $0x140] sm:$0xff]
    %v1408 = vld [vmem:[%s1366 + $0x148] sm:$0xff]
    %v1409 = vld [vmem:[%s1366 + $0x150] sm:$0xff]
    %v1410 = vld [vmem:[%s1366 + $0x158] sm:$0xff]
    %v1411 = vld [vmem:[%s1366 + $0x160] sm:$0xff]
    %v1412 = vld [vmem:[%s1366 + $0x168] sm:$0xff]
    %v1413 = vld [vmem:[%s1366 + $0x170] sm:$0xff]
    %v1414 = vld [vmem:[%s1366 + $0x178] sm:$0xff]
    %v1463 = vunpack.c.l.b16 %v1367
    %v1464 = vunpack.c.h.b16 %v1367
    %v1465 = vunpack.c.l.b16 %v1368
    %v1466 = vunpack.c.h.b16 %v1368
    %v1467 = vunpack.c.l.b16 %v1369
    %v1468 = vunpack.c.h.b16 %v1369
    %v1469 = vunpack.c.l.b16 %v1370
    %v1470 = vunpack.c.h.b16 %v1370
    %v1471 = vunpack.c.l.b16 %v1371
    %v1472 = vunpack.c.h.b16 %v1371
    %v1473 = vunpack.c.l.b16 %v1372
    %v1474 = vunpack.c.h.b16 %v1372
    %v1475 = vunpack.c.l.b16 %v1373
    %v1476 = vunpack.c.h.b16 %v1373
    %v1477 = vunpack.c.l.b16 %v1374
    %v1478 = vunpack.c.h.b16 %v1374
    %v1479 = vunpack.c.l.b16 %v1375
    %v1480 = vunpack.c.h.b16 %v1375
    %v1481 = vunpack.c.l.b16 %v1376
    %v1482 = vunpack.c.h.b16 %v1376
    %v1483 = vunpack.c.l.b16 %v1377
    %v1484 = vunpack.c.h.b16 %v1377
    %v1485 = vunpack.c.l.b16 %v1378
    %v1486 = vunpack.c.h.b16 %v1378
    %v1487 = vunpack.c.l.b16 %v1379
    %v1488 = vunpack.c.h.b16 %v1379
    %v1489 = vunpack.c.l.b16 %v1380
    %v1490 = vunpack.c.h.b16 %v1380
    %v1491 = vunpack.c.l.b16 %v1381
    %v1492 = vunpack.c.h.b16 %v1381
    %v1493 = vunpack.c.l.b16 %v1382
    %v1494 = vunpack.c.h.b16 %v1382
    %v1495 = vunpack.c.l.b16 %v1383
    %v1496 = vunpack.c.h.b16 %v1383
    %v1497 = vunpack.c.l.b16 %v1384
    %v1498 = vunpack.c.h.b16 %v1384
    %v1499 = vunpack.c.l.b16 %v1385
    %v1500 = vunpack.c.h.b16 %v1385
    %v1501 = vunpack.c.l.b16 %v1386
    %v1502 = vunpack.c.h.b16 %v1386
    %v1503 = vunpack.c.l.b16 %v1387
    %v1504 = vunpack.c.h.b16 %v1387
    %v1505 = vunpack.c.l.b16 %v1388
    %v1506 = vunpack.c.h.b16 %v1388
    %v1507 = vunpack.c.l.b16 %v1389
    %v1508 = vunpack.c.h.b16 %v1389
    %v1509 = vunpack.c.l.b16 %v1390
    %v1510 = vunpack.c.h.b16 %v1390
    %v1511 = vunpack.c.l.b16 %v1391
    %v1512 = vunpack.c.h.b16 %v1391
    %v1513 = vunpack.c.l.b16 %v1392
    %v1514 = vunpack.c.h.b16 %v1392
    %v1515 = vunpack.c.l.b16 %v1393
    %v1516 = vunpack.c.h.b16 %v1393
    %v1517 = vunpack.c.l.b16 %v1394
    %v1518 = vunpack.c.h.b16 %v1394
    %v1519 = vunpack.c.l.b16 %v1395
    %v1520 = vunpack.c.h.b16 %v1395
    %v1521 = vunpack.c.l.b16 %v1396
    %v1522 = vunpack.c.h.b16 %v1396
    %v1523 = vunpack.c.l.b16 %v1397
    %v1524 = vunpack.c.h.b16 %v1397
    %v1525 = vunpack.c.l.b16 %v1398
    %v1526 = vunpack.c.h.b16 %v1398
    %v1527 = vunpack.c.l.b16 %v1399
    %v1528 = vunpack.c.h.b16 %v1399
    %v1529 = vunpack.c.l.b16 %v1400
    %v1530 = vunpack.c.h.b16 %v1400
    %v1531 = vunpack.c.l.b16 %v1401
    %v1532 = vunpack.c.h.b16 %v1401
    %v1533 = vunpack.c.l.b16 %v1402
    %v1534 = vunpack.c.h.b16 %v1402
    %v1535 = vunpack.c.l.b16 %v1403
    %v1536 = vunpack.c.h.b16 %v1403
    %v1537 = vunpack.c.l.b16 %v1404
    %v1538 = vunpack.c.h.b16 %v1404
    %v1539 = vunpack.c.l.b16 %v1405
    %v1540 = vunpack.c.h.b16 %v1405
    %v1541 = vunpack.c.l.b16 %v1406
    %v1542 = vunpack.c.h.b16 %v1406
    %v1543 = vunpack.c.l.b16 %v1407
    %v1544 = vunpack.c.h.b16 %v1407
    %v1545 = vunpack.c.l.b16 %v1408
    %v1546 = vunpack.c.h.b16 %v1408
    %v1547 = vunpack.c.l.b16 %v1409
    %v1548 = vunpack.c.h.b16 %v1409
    %v1549 = vunpack.c.l.b16 %v1410
    %v1550 = vunpack.c.h.b16 %v1410
    %v1551 = vunpack.c.l.b16 %v1411
    %v1552 = vunpack.c.h.b16 %v1411
    %v1553 = vunpack.c.l.b16 %v1412
    %v1554 = vunpack.c.h.b16 %v1412
    %v1555 = vunpack.c.l.b16 %v1413
    %v1556 = vunpack.c.h.b16 %v1413
    %v1557 = vunpack.c.l.b16 %v1414
    %v1558 = vunpack.c.h.b16 %v1414
    %v1559 = vpack.c.b16 %v1469, %v1463
    %v1560 = vpack.c.b16 %v1470, %v1464
    %v1561 = vpack.c.b16 %v1471, %v1465
    %v1562 = vpack.c.b16 %v1472, %v1466
    %v1563 = vpack.c.b16 %v1473, %v1467
    %v1564 = vpack.c.b16 %v1474, %v1468
    %v1565 = vpack.c.b16 %v1481, %v1475
    %v1566 = vpack.c.b16 %v1482, %v1476
    %v1567 = vpack.c.b16 %v1483, %v1477
    %v1568 = vpack.c.b16 %v1484, %v1478
    %v1569 = vpack.c.b16 %v1485, %v1479
    %v1570 = vpack.c.b16 %v1486, %v1480
    %v1571 = vpack.c.b16 %v1493, %v1487
    %v1572 = vpack.c.b16 %v1494, %v1488
    %v1573 = vpack.c.b16 %v1495, %v1489
    %v1574 = vpack.c.b16 %v1496, %v1490
    %v1575 = vpack.c.b16 %v1497, %v1491
    %v1576 = vpack.c.b16 %v1498, %v1492
    %v1577 = vpack.c.b16 %v1505, %v1499
    %v1578 = vpack.c.b16 %v1506, %v1500
    %v1579 = vpack.c.b16 %v1507, %v1501
    %v1580 = vpack.c.b16 %v1508, %v1502
    %v1581 = vpack.c.b16 %v1509, %v1503
    %v1582 = vpack.c.b16 %v1510, %v1504
    %v1583 = vpack.c.b16 %v1517, %v1511
    %v1584 = vpack.c.b16 %v1518, %v1512
    %v1585 = vpack.c.b16 %v1519, %v1513
    %v1586 = vpack.c.b16 %v1520, %v1514
    %v1587 = vpack.c.b16 %v1521, %v1515
    %v1588 = vpack.c.b16 %v1522, %v1516
    %v1589 = vpack.c.b16 %v1529, %v1523
    %v1590 = vpack.c.b16 %v1530, %v1524
    %v1591 = vpack.c.b16 %v1531, %v1525
    %v1592 = vpack.c.b16 %v1532, %v1526
    %v1593 = vpack.c.b16 %v1533, %v1527
    %v1594 = vpack.c.b16 %v1534, %v1528
    %v1595 = vpack.c.b16 %v1541, %v1535
    %v1596 = vpack.c.b16 %v1542, %v1536
    %v1597 = vpack.c.b16 %v1543, %v1537
    %v1598 = vpack.c.b16 %v1544, %v1538
    %v1599 = vpack.c.b16 %v1545, %v1539
    %v1600 = vpack.c.b16 %v1546, %v1540
    %v1601 = vpack.c.b16 %v1553, %v1547
    %v1602 = vpack.c.b16 %v1554, %v1548
    %v1603 = vpack.c.b16 %v1555, %v1549
    %v1604 = vpack.c.b16 %v1556, %v1550
    %v1605 = vpack.c.b16 %v1557, %v1551
    %v1606 = vpack.c.b16 %v1558, %v1552
    %1655 = vmatprep.subr.bf16.mxu0 %v1560
    %1656 = vmatpush1.bf16.msra.mxu0 %v1559
    %1657 = vmatprep.subr.bf16.mxu0 %v1566
    %1658 = vmatpush1.bf16.msra.mxu0 %v1565
    %1659 = vmatprep.subr.bf16.mxu0 %v1572
    %1660 = vmatpush1.bf16.msra.mxu0 %v1571
    %1661 = vmatprep.subr.bf16.mxu0 %v1578
    %1662 = vmatpush1.bf16.msra.mxu0 %v1577
    %1663 = vmatprep.subr.bf16.mxu0 %v1584
    %1664 = vmatpush1.bf16.msra.mxu0 %v1583
    %1665 = vmatprep.subr.bf16.mxu0 %v1590
    %1666 = vmatpush1.bf16.msra.mxu0 %v1589
    %1667 = vmatprep.subr.bf16.mxu0 %v1596
    %1668 = vmatpush1.bf16.msra.mxu0 %v1595
    %1669 = vmatprep.subr.bf16.mxu0 %v1602
    %1670 = vmatpush1.bf16.msra.mxu0 %v1601
    %1671 = vmatprep.subr.bf16.mxu0 0
    %1672 = vmatpush1.bf16.msra.mxu0 0
    %1673 = vmatprep.subr.bf16.mxu0 0
    %1674 = vmatpush1.bf16.msra.mxu0 0
    %1675 = vmatprep.subr.bf16.mxu0 0
    %1676 = vmatpush1.bf16.msra.mxu0 0
    %1677 = vmatprep.subr.bf16.mxu0 0
    %1678 = vmatpush1.bf16.msra.mxu0 0
    %1679 = vmatprep.subr.bf16.mxu0 0
    %1680 = vmatpush1.bf16.msra.mxu0 0
    %1681 = vmatprep.subr.bf16.mxu0 0
    %1682 = vmatpush1.bf16.msra.mxu0 0
    %1683 = vmatprep.subr.bf16.mxu0 0
    %1684 = vmatpush1.bf16.msra.mxu0 0
    %1685 = vmatprep.subr.bf16.mxu0 0
    %1686 = vmatpush1.bf16.msra.mxu0 0
    %1687 = vmatprep.mubr.bf16.mxu0 0
    %1688 = vmatmul.mubr.bf16.gmra.mrb[0].mxu0 %v1365
    %v1689 = vpop.f32.mrb[0].mxu0
    %v1690 = vadd.f32 0.0, %v1689
    %v1691 = vpop.f32.mrb[0].mxu0
    %v1692 = vadd.f32 0.0, %v1691
    %v1693 = vpop.f32.mrb[0].mxu0
    %v1694 = vpop.f32.mrb[0].mxu0
    %1695 = vdwg.mxu0
    %1696 = vmatprep.subr.bf16.mxu0 %v1562
    %1697 = vmatpush1.bf16.msra.mxu0 %v1561
    %1698 = vmatprep.subr.bf16.mxu0 %v1568
    %1699 = vmatpush1.bf16.msra.mxu0 %v1567
    %1700 = vmatprep.subr.bf16.mxu0 %v1574
    %1701 = vmatpush1.bf16.msra.mxu0 %v1573
    %1702 = vmatprep.subr.bf16.mxu0 %v1580
    %1703 = vmatpush1.bf16.msra.mxu0 %v1579
    %1704 = vmatprep.subr.bf16.mxu0 %v1586
    %1705 = vmatpush1.bf16.msra.mxu0 %v1585
    %1706 = vmatprep.subr.bf16.mxu0 %v1592
    %1707 = vmatpush1.bf16.msra.mxu0 %v1591
    %1708 = vmatprep.subr.bf16.mxu0 %v1598
    %1709 = vmatpush1.bf16.msra.mxu0 %v1597
    %1710 = vmatprep.subr.bf16.mxu0 %v1604
    %1711 = vmatpush1.bf16.msra.mxu0 %v1603
    %1712 = vmatprep.subr.bf16.mxu0 0
    %1713 = vmatpush1.bf16.msra.mxu0 0
    %1714 = vmatprep.subr.bf16.mxu0 0
    %1715 = vmatpush1.bf16.msra.mxu0 0
    %1716 = vmatprep.subr.bf16.mxu0 0
    %1717 = vmatpush1.bf16.msra.mxu0 0
    %1718 = vmatprep.subr.bf16.mxu0 0
    %1719 = vmatpush1.bf16.msra.mxu0 0
    %1720 = vmatprep.subr.bf16.mxu0 0
    %1721 = vmatpush1.bf16.msra.mxu0 0
    %1722 = vmatprep.subr.bf16.mxu0 0
    %1723 = vmatpush1.bf16.msra.mxu0 0
    %1724 = vmatprep.subr.bf16.mxu0 0
    %1725 = vmatpush1.bf16.msra.mxu0 0
    %1726 = vmatprep.subr.bf16.mxu0 0
    %1727 = vmatpush1.bf16.msra.mxu0 0
    %1728 = vmatprep.mubr.bf16.mxu0 0
    %1729 = vmatmul.mubr.bf16.gmra.mrb[0].mxu0 %v1365
    %v1730 = vpop.f32.mrb[0].mxu0
    %v1731 = vadd.f32 0.0, %v1730
    %v1732 = vpop.f32.mrb[0].mxu0
    %v1733 = vadd.f32 0.0, %v1732
    %v1734 = vpop.f32.mrb[0].mxu0
    %v1735 = vpop.f32.mrb[0].mxu0
    %1736 = vdwg.mxu0
    %1737 = vmatprep.subr.bf16.mxu0 %v1564
    %1738 = vmatpush1.bf16.msra.mxu0 %v1563
    %1739 = vmatprep.subr.bf16.mxu0 %v1570
    %1740 = vmatpush1.bf16.msra.mxu0 %v1569
    %1741 = vmatprep.subr.bf16.mxu0 %v1576
    %1742 = vmatpush1.bf16.msra.mxu0 %v1575
    %1743 = vmatprep.subr.bf16.mxu0 %v1582
    %1744 = vmatpush1.bf16.msra.mxu0 %v1581
    %1745 = vmatprep.subr.bf16.mxu0 %v1588
    %1746 = vmatpush1.bf16.msra.mxu0 %v1587
    %1747 = vmatprep.subr.bf16.mxu0 %v1594
    %1748 = vmatpush1.bf16.msra.mxu0 %v1593
    %1749 = vmatprep.subr.bf16.mxu0 %v1600
    %1750 = vmatpush1.bf16.msra.mxu0 %v1599
    %1751 = vmatprep.subr.bf16.mxu0 %v1606
    %1752 = vmatpush1.bf16.msra.mxu0 %v1605
    %1753 = vmatprep.subr.bf16.mxu0 0
    %1754 = vmatpush1.bf16.msra.mxu0 0
    %1755 = vmatprep.subr.bf16.mxu0 0
    %1756 = vmatpush1.bf16.msra.mxu0 0
    %1757 = vmatprep.subr.bf16.mxu0 0
    %1758 = vmatpush1.bf16.msra.mxu0 0
    %1759 = vmatprep.subr.bf16.mxu0 0
    %1760 = vmatpush1.bf16.msra.mxu0 0
    %1761 = vmatprep.subr.bf16.mxu0 0
    %1762 = vmatpush1.bf16.msra.mxu0 0
    %1763 = vmatprep.subr.bf16.mxu0 0
    %1764 = vmatpush1.bf16.msra.mxu0 0
    %1765 = vmatprep.subr.bf16.mxu0 0
    %1766 = vmatpush1.bf16.msra.mxu0 0
    %1767 = vmatprep.subr.bf16.mxu0 0
    %1768 = vmatpush1.bf16.msra.mxu0 0
    %1769 = vmatprep.mubr.bf16.mxu0 0
    %1770 = vmatmul.mubr.bf16.gmra.mrb[0].mxu0 %v1365
    %v1771 = vpop.f32.mrb[0].mxu0
    %v1772 = vadd.f32 0.0, %v1771
    %v1773 = vpop.f32.mrb[0].mxu0
    %v1774 = vadd.f32 0.0, %v1773
    %v1775 = vpop.f32.mrb[0].mxu0
    %v1776 = vpop.f32.mrb[0].mxu0
    %1777 = vdwg.mxu0
    %v1778 = vadd.f32 %v1211, %v1690
    %v1779 = vadd.f32 %v1213, %v1692
    %v1780 = vadd.f32 %v1252, %v1731
    %v1781 = vadd.f32 %v1254, %v1733
    %v1782 = vadd.f32 %v1293, %v1772
    %v1783 = vadd.f32 %v1295, %v1774
    %v1784 = vadd.f32 %v464, 0.0
    %v1785 = vadd.f32 %v1784, %v471
    %v1786 = vadd.f32 %v1785, %v478
    %v1787 = vadd.f32 %v1305, %v1307
    %v1788 = vadd.f32 %v1787, %v1309
    %v1789 = vsel %vm232, %v221, 0.0
    %v1790 = vadd.f32 %v1788, %v1789
    %v1791 = vsel %vm232, %v222, 0.0
    %v1792 = vadd.f32 %v1790, %v1791
    %v1793 = vadd.f32 %v1786, %v1792
    %v1794 = vadd.f32 %v1315, %v1317
    %v1795 = vadd.f32 %v1794, %v1319
    %v1796 = vsel %vm232, %v228, 0.0
    %v1797 = vadd.f32 %v1795, %v1796
    %v1798 = vsel %vm232, %v229, 0.0
    %v1799 = vadd.f32 %v1797, %v1798
    %v1800 = vadd.f32 %v1793, %v1799
    %v1801 = vmul.f32 %v1800, 0.04
    %v1802 = vpack.c.bf16 %v1801, %v1801
    %1803 = vmatprep.subr.bf16.mxu0 0
    %1804 = vmatpush1.bf16.msra.mxu0 %v339
    %1805 = vmatprep.subr.bf16.mxu0 0
    %1806 = vmatpush1.bf16.msra.mxu0 %v340
    %1807 = vmatprep.subr.bf16.mxu0 0
    %1808 = vmatpush1.bf16.msra.mxu0 %v341
    %1809 = vmatprep.subr.bf16.mxu0 0
    %1810 = vmatpush1.bf16.msra.mxu0 %v342
    %1811 = vmatprep.subr.bf16.mxu0 0
    %1812 = vmatpush1.bf16.msra.mxu0 %v343
    %1813 = vmatprep.subr.bf16.mxu0 0
    %1814 = vmatpush1.bf16.msra.mxu0 %v344
    %1815 = vmatprep.subr.bf16.mxu0 0
    %1816 = vmatpush1.bf16.msra.mxu0 %v345
    %1817 = vmatprep.subr.bf16.mxu0 0
    %1818 = vmatpush1.bf16.msra.mxu0 %v346
    %1819 = vmatprep.subr.bf16.mxu0 0
    %1820 = vmatpush1.bf16.msra.mxu0 0
    %1821 = vmatprep.subr.bf16.mxu0 0
    %1822 = vmatpush1.bf16.msra.mxu0 0
    %1823 = vmatprep.subr.bf16.mxu0 0
    %1824 = vmatpush1.bf16.msra.mxu0 0
    %1825 = vmatprep.subr.bf16.mxu0 0
    %1826 = vmatpush1.bf16.msra.mxu0 0
    %1827 = vmatprep.subr.bf16.mxu0 0
    %1828 = vmatpush1.bf16.msra.mxu0 0
    %1829 = vmatprep.subr.bf16.mxu0 0
    %1830 = vmatpush1.bf16.msra.mxu0 0
    %1831 = vmatprep.subr.bf16.mxu0 0
    %1832 = vmatpush1.bf16.msra.mxu0 0
    %1833 = vmatprep.subr.bf16.mxu0 0
    %1834 = vmatpush1.bf16.msra.mxu0 0
    %1835 = vmatprep.mubr.bf16.mxu0 0
    %1836 = vmatmul.mubr.bf16.gmra.mrb[0].mxu0 %v1802
    %v1837 = vpop.f32.mrb[0].mxu0
    %v1838 = vadd.f32 %v305, %v1837
    %v1839 = vpop.f32.mrb[0].mxu0
    %v1840 = vpop.f32.mrb[0].mxu0
    %v1841 = vpop.f32.mrb[0].mxu0
    %1842 = vdwg.mxu0
    %v1843 = vmax.f32 %v1838, 0.0
    %v1844 = vpack.c.bf16 %v1843, %v1843
    %s1845 = scalar_lea.vmem [#allocation7], 1152
    %v1846 = vld [vmem:[%s1845] sm:$0xff]
    %v1847 = vld [vmem:[%s1845 + $0x8] sm:$0xff]
    %v1848 = vld [vmem:[%s1845 + $0x10] sm:$0xff]
    %v1849 = vld [vmem:[%s1845 + $0x18] sm:$0xff]
    %v1850 = vld [vmem:[%s1845 + $0x20] sm:$0xff]
    %v1851 = vld [vmem:[%s1845 + $0x28] sm:$0xff]
    %v1852 = vld [vmem:[%s1845 + $0x30] sm:$0xff]
    %v1853 = vld [vmem:[%s1845 + $0x38] sm:$0xff]
    %v1854 = vld [vmem:[%s1845 + $0x40] sm:$0xff]
    %v1855 = vld [vmem:[%s1845 + $0x48] sm:$0xff]
    %v1856 = vld [vmem:[%s1845 + $0x50] sm:$0xff]
    %v1857 = vld [vmem:[%s1845 + $0x58] sm:$0xff]
    %v1858 = vld [vmem:[%s1845 + $0x60] sm:$0xff]
    %v1859 = vld [vmem:[%s1845 + $0x68] sm:$0xff]
    %v1860 = vld [vmem:[%s1845 + $0x70] sm:$0xff]
    %v1861 = vld [vmem:[%s1845 + $0x78] sm:$0xff]
    %v1862 = vld [vmem:[%s1845 + $0x80] sm:$0xff]
    %v1863 = vld [vmem:[%s1845 + $0x88] sm:$0xff]
    %v1864 = vld [vmem:[%s1845 + $0x90] sm:$0xff]
    %v1865 = vld [vmem:[%s1845 + $0x98] sm:$0xff]
    %v1866 = vld [vmem:[%s1845 + $0xa0] sm:$0xff]
    %v1867 = vld [vmem:[%s1845 + $0xa8] sm:$0xff]
    %v1868 = vld [vmem:[%s1845 + $0xb0] sm:$0xff]
    %v1869 = vld [vmem:[%s1845 + $0xb8] sm:$0xff]
    %v1870 = vld [vmem:[%s1845 + $0xc0] sm:$0xff]
    %v1871 = vld [vmem:[%s1845 + $0xc8] sm:$0xff]
    %v1872 = vld [vmem:[%s1845 + $0xd0] sm:$0xff]
    %v1873 = vld [vmem:[%s1845 + $0xd8] sm:$0xff]
    %v1874 = vld [vmem:[%s1845 + $0xe0] sm:$0xff]
    %v1875 = vld [vmem:[%s1845 + $0xe8] sm:$0xff]
    %v1876 = vld [vmem:[%s1845 + $0xf0] sm:$0xff]
    %v1877 = vld [vmem:[%s1845 + $0xf8] sm:$0xff]
    %v1878 = vld [vmem:[%s1845 + $0x100] sm:$0xff]
    %v1879 = vld [vmem:[%s1845 + $0x108] sm:$0xff]
    %v1880 = vld [vmem:[%s1845 + $0x110] sm:$0xff]
    %v1881 = vld [vmem:[%s1845 + $0x118] sm:$0xff]
    %v1882 = vld [vmem:[%s1845 + $0x120] sm:$0xff]
    %v1883 = vld [vmem:[%s1845 + $0x128] sm:$0xff]
    %v1884 = vld [vmem:[%s1845 + $0x130] sm:$0xff]
    %v1885 = vld [vmem:[%s1845 + $0x138] sm:$0xff]
    %v1886 = vld [vmem:[%s1845 + $0x140] sm:$0xff]
    %v1887 = vld [vmem:[%s1845 + $0x148] sm:$0xff]
    %v1888 = vld [vmem:[%s1845 + $0x150] sm:$0xff]
    %v1889 = vld [vmem:[%s1845 + $0x158] sm:$0xff]
    %v1890 = vld [vmem:[%s1845 + $0x160] sm:$0xff]
    %v1891 = vld [vmem:[%s1845 + $0x168] sm:$0xff]
    %v1892 = vld [vmem:[%s1845 + $0x170] sm:$0xff]
    %v1893 = vld [vmem:[%s1845 + $0x178] sm:$0xff]
    %v1942 = vunpack.c.l.b16 %v1846
    %v1943 = vunpack.c.h.b16 %v1846
    %v1944 = vunpack.c.l.b16 %v1847
    %v1945 = vunpack.c.h.b16 %v1847
    %v1946 = vunpack.c.l.b16 %v1848
    %v1947 = vunpack.c.h.b16 %v1848
    %v1948 = vunpack.c.l.b16 %v1849
    %v1949 = vunpack.c.h.b16 %v1849
    %v1950 = vunpack.c.l.b16 %v1850
    %v1951 = vunpack.c.h.b16 %v1850
    %v1952 = vunpack.c.l.b16 %v1851
    %v1953 = vunpack.c.h.b16 %v1851
    %v1954 = vunpack.c.l.b16 %v1852
    %v1955 = vunpack.c.h.b16 %v1852
    %v1956 = vunpack.c.l.b16 %v1853
    %v1957 = vunpack.c.h.b16 %v1853
    %v1958 = vunpack.c.l.b16 %v1854
    %v1959 = vunpack.c.h.b16 %v1854
    %v1960 = vunpack.c.l.b16 %v1855
    %v1961 = vunpack.c.h.b16 %v1855
    %v1962 = vunpack.c.l.b16 %v1856
    %v1963 = vunpack.c.h.b16 %v1856
    %v1964 = vunpack.c.l.b16 %v1857
    %v1965 = vunpack.c.h.b16 %v1857
    %v1966 = vunpack.c.l.b16 %v1858
    %v1967 = vunpack.c.h.b16 %v1858
    %v1968 = vunpack.c.l.b16 %v1859
    %v1969 = vunpack.c.h.b16 %v1859
    %v1970 = vunpack.c.l.b16 %v1860
    %v1971 = vunpack.c.h.b16 %v1860
    %v1972 = vunpack.c.l.b16 %v1861
    %v1973 = vunpack.c.h.b16 %v1861
    %v1974 = vunpack.c.l.b16 %v1862
    %v1975 = vunpack.c.h.b16 %v1862
    %v1976 = vunpack.c.l.b16 %v1863
    %v1977 = vunpack.c.h.b16 %v1863
    %v1978 = vunpack.c.l.b16 %v1864
    %v1979 = vunpack.c.h.b16 %v1864
    %v1980 = vunpack.c.l.b16 %v1865
    %v1981 = vunpack.c.h.b16 %v1865
    %v1982 = vunpack.c.l.b16 %v1866
    %v1983 = vunpack.c.h.b16 %v1866
    %v1984 = vunpack.c.l.b16 %v1867
    %v1985 = vunpack.c.h.b16 %v1867
    %v1986 = vunpack.c.l.b16 %v1868
    %v1987 = vunpack.c.h.b16 %v1868
    %v1988 = vunpack.c.l.b16 %v1869
    %v1989 = vunpack.c.h.b16 %v1869
    %v1990 = vunpack.c.l.b16 %v1870
    %v1991 = vunpack.c.h.b16 %v1870
    %v1992 = vunpack.c.l.b16 %v1871
    %v1993 = vunpack.c.h.b16 %v1871
    %v1994 = vunpack.c.l.b16 %v1872
    %v1995 = vunpack.c.h.b16 %v1872
    %v1996 = vunpack.c.l.b16 %v1873
    %v1997 = vunpack.c.h.b16 %v1873
    %v1998 = vunpack.c.l.b16 %v1874
    %v1999 = vunpack.c.h.b16 %v1874
    %v2000 = vunpack.c.l.b16 %v1875
    %v2001 = vunpack.c.h.b16 %v1875
    %v2002 = vunpack.c.l.b16 %v1876
    %v2003 = vunpack.c.h.b16 %v1876
    %v2004 = vunpack.c.l.b16 %v1877
    %v2005 = vunpack.c.h.b16 %v1877
    %v2006 = vunpack.c.l.b16 %v1878
    %v2007 = vunpack.c.h.b16 %v1878
    %v2008 = vunpack.c.l.b16 %v1879
    %v2009 = vunpack.c.h.b16 %v1879
    %v2010 = vunpack.c.l.b16 %v1880
    %v2011 = vunpack.c.h.b16 %v1880
    %v2012 = vunpack.c.l.b16 %v1881
    %v2013 = vunpack.c.h.b16 %v1881
    %v2014 = vunpack.c.l.b16 %v1882
    %v2015 = vunpack.c.h.b16 %v1882
    %v2016 = vunpack.c.l.b16 %v1883
    %v2017 = vunpack.c.h.b16 %v1883
    %v2018 = vunpack.c.l.b16 %v1884
    %v2019 = vunpack.c.h.b16 %v1884
    %v2020 = vunpack.c.l.b16 %v1885
    %v2021 = vunpack.c.h.b16 %v1885
    %v2022 = vunpack.c.l.b16 %v1886
    %v2023 = vunpack.c.h.b16 %v1886
    %v2024 = vunpack.c.l.b16 %v1887
    %v2025 = vunpack.c.h.b16 %v1887
    %v2026 = vunpack.c.l.b16 %v1888
    %v2027 = vunpack.c.h.b16 %v1888
    %v2028 = vunpack.c.l.b16 %v1889
    %v2029 = vunpack.c.h.b16 %v1889
    %v2030 = vunpack.c.l.b16 %v1890
    %v2031 = vunpack.c.h.b16 %v1890
    %v2032 = vunpack.c.l.b16 %v1891
    %v2033 = vunpack.c.h.b16 %v1891
    %v2034 = vunpack.c.l.b16 %v1892
    %v2035 = vunpack.c.h.b16 %v1892
    %v2036 = vunpack.c.l.b16 %v1893
    %v2037 = vunpack.c.h.b16 %v1893
    %v2038 = vpack.c.b16 %v1948, %v1942
    %v2039 = vpack.c.b16 %v1949, %v1943
    %v2040 = vpack.c.b16 %v1950, %v1944
    %v2041 = vpack.c.b16 %v1951, %v1945
    %v2042 = vpack.c.b16 %v1952, %v1946
    %v2043 = vpack.c.b16 %v1953, %v1947
    %v2044 = vpack.c.b16 %v1960, %v1954
    %v2045 = vpack.c.b16 %v1961, %v1955
    %v2046 = vpack.c.b16 %v1962, %v1956
    %v2047 = vpack.c.b16 %v1963, %v1957
    %v2048 = vpack.c.b16 %v1964, %v1958
    %v2049 = vpack.c.b16 %v1965, %v1959
    %v2050 = vpack.c.b16 %v1972, %v1966
    %v2051 = vpack.c.b16 %v1973, %v1967
    %v2052 = vpack.c.b16 %v1974, %v1968
    %v2053 = vpack.c.b16 %v1975, %v1969
    %v2054 = vpack.c.b16 %v1976, %v1970
    %v2055 = vpack.c.b16 %v1977, %v1971
    %v2056 = vpack.c.b16 %v1984, %v1978
    %v2057 = vpack.c.b16 %v1985, %v1979
    %v2058 = vpack.c.b16 %v1986, %v1980
    %v2059 = vpack.c.b16 %v1987, %v1981
    %v2060 = vpack.c.b16 %v1988, %v1982
    %v2061 = vpack.c.b16 %v1989, %v1983
    %v2062 = vpack.c.b16 %v1996, %v1990
    %v2063 = vpack.c.b16 %v1997, %v1991
    %v2064 = vpack.c.b16 %v1998, %v1992
    %v2065 = vpack.c.b16 %v1999, %v1993
    %v2066 = vpack.c.b16 %v2000, %v1994
    %v2067 = vpack.c.b16 %v2001, %v1995
    %v2068 = vpack.c.b16 %v2008, %v2002
    %v2069 = vpack.c.b16 %v2009, %v2003
    %v2070 = vpack.c.b16 %v2010, %v2004
    %v2071 = vpack.c.b16 %v2011, %v2005
    %v2072 = vpack.c.b16 %v2012, %v2006
    %v2073 = vpack.c.b16 %v2013, %v2007
    %v2074 = vpack.c.b16 %v2020, %v2014
    %v2075 = vpack.c.b16 %v2021, %v2015
    %v2076 = vpack.c.b16 %v2022, %v2016
    %v2077 = vpack.c.b16 %v2023, %v2017
    %v2078 = vpack.c.b16 %v2024, %v2018
    %v2079 = vpack.c.b16 %v2025, %v2019
    %v2080 = vpack.c.b16 %v2032, %v2026
    %v2081 = vpack.c.b16 %v2033, %v2027
    %v2082 = vpack.c.b16 %v2034, %v2028
    %v2083 = vpack.c.b16 %v2035, %v2029
    %v2084 = vpack.c.b16 %v2036, %v2030
    %v2085 = vpack.c.b16 %v2037, %v2031
    %2134 = vmatprep.subr.bf16.mxu0 %v2039
    %2135 = vmatpush1.bf16.msra.mxu0 %v2038
    %2136 = vmatprep.subr.bf16.mxu0 %v2045
    %2137 = vmatpush1.bf16.msra.mxu0 %v2044
    %2138 = vmatprep.subr.bf16.mxu0 %v2051
    %2139 = vmatpush1.bf16.msra.mxu0 %v2050
    %2140 = vmatprep.subr.bf16.mxu0 %v2057
    %2141 = vmatpush1.bf16.msra.mxu0 %v2056
    %2142 = vmatprep.subr.bf16.mxu0 %v2063
    %2143 = vmatpush1.bf16.msra.mxu0 %v2062
    %2144 = vmatprep.subr.bf16.mxu0 %v2069
    %2145 = vmatpush1.bf16.msra.mxu0 %v2068
    %2146 = vmatprep.subr.bf16.mxu0 %v2075
    %2147 = vmatpush1.bf16.msra.mxu0 %v2074
    %2148 = vmatprep.subr.bf16.mxu0 %v2081
    %2149 = vmatpush1.bf16.msra.mxu0 %v2080
    %2150 = vmatprep.subr.bf16.mxu0 0
    %2151 = vmatpush1.bf16.msra.mxu0 0
    %2152 = vmatprep.subr.bf16.mxu0 0
    %2153 = vmatpush1.bf16.msra.mxu0 0
    %2154 = vmatprep.subr.bf16.mxu0 0
    %2155 = vmatpush1.bf16.msra.mxu0 0
    %2156 = vmatprep.subr.bf16.mxu0 0
    %2157 = vmatpush1.bf16.msra.mxu0 0
    %2158 = vmatprep.subr.bf16.mxu0 0
    %2159 = vmatpush1.bf16.msra.mxu0 0
    %2160 = vmatprep.subr.bf16.mxu0 0
    %2161 = vmatpush1.bf16.msra.mxu0 0
    %2162 = vmatprep.subr.bf16.mxu0 0
    %2163 = vmatpush1.bf16.msra.mxu0 0
    %2164 = vmatprep.subr.bf16.mxu0 0
    %2165 = vmatpush1.bf16.msra.mxu0 0
    %2166 = vmatprep.mubr.bf16.mxu0 0
    %2167 = vmatmul.mubr.bf16.gmra.mrb[0].mxu0 %v1844
    %v2168 = vpop.f32.mrb[0].mxu0
    %v2169 = vadd.f32 0.0, %v2168
    %v2170 = vpop.f32.mrb[0].mxu0
    %v2171 = vadd.f32 0.0, %v2170
    %v2172 = vpop.f32.mrb[0].mxu0
    %v2173 = vpop.f32.mrb[0].mxu0
    %2174 = vdwg.mxu0
    %2175 = vmatprep.subr.bf16.mxu0 %v2041
    %2176 = vmatpush1.bf16.msra.mxu0 %v2040
    %2177 = vmatprep.subr.bf16.mxu0 %v2047
    %2178 = vmatpush1.bf16.msra.mxu0 %v2046
    %2179 = vmatprep.subr.bf16.mxu0 %v2053
    %2180 = vmatpush1.bf16.msra.mxu0 %v2052
    %2181 = vmatprep.subr.bf16.mxu0 %v2059
    %2182 = vmatpush1.bf16.msra.mxu0 %v2058
    %2183 = vmatprep.subr.bf16.mxu0 %v2065
    %2184 = vmatpush1.bf16.msra.mxu0 %v2064
    %2185 = vmatprep.subr.bf16.mxu0 %v2071
    %2186 = vmatpush1.bf16.msra.mxu0 %v2070
    %2187 = vmatprep.subr.bf16.mxu0 %v2077
    %2188 = vmatpush1.bf16.msra.mxu0 %v2076
    %2189 = vmatprep.subr.bf16.mxu0 %v2083
    %2190 = vmatpush1.bf16.msra.mxu0 %v2082
    %2191 = vmatprep.subr.bf16.mxu0 0
    %2192 = vmatpush1.bf16.msra.mxu0 0
    %2193 = vmatprep.subr.bf16.mxu0 0
    %2194 = vmatpush1.bf16.msra.mxu0 0
    %2195 = vmatprep.subr.bf16.mxu0 0
    %2196 = vmatpush1.bf16.msra.mxu0 0
    %2197 = vmatprep.subr.bf16.mxu0 0
    %2198 = vmatpush1.bf16.msra.mxu0 0
    %2199 = vmatprep.subr.bf16.mxu0 0
    %2200 = vmatpush1.bf16.msra.mxu0 0
    %2201 = vmatprep.subr.bf16.mxu0 0
    %2202 = vmatpush1.bf16.msra.mxu0 0
    %2203 = vmatprep.subr.bf16.mxu0 0
    %2204 = vmatpush1.bf16.msra.mxu0 0
    %2205 = vmatprep.subr.bf16.mxu0 0
    %2206 = vmatpush1.bf16.msra.mxu0 0
    %2207 = vmatprep.mubr.bf16.mxu0 0
    %2208 = vmatmul.mubr.bf16.gmra.mrb[0].mxu0 %v1844
    %v2209 = vpop.f32.mrb[0].mxu0
    %v2210 = vadd.f32 0.0, %v2209
    %v2211 = vpop.f32.mrb[0].mxu0
    %v2212 = vadd.f32 0.0, %v2211
    %v2213 = vpop.f32.mrb[0].mxu0
    %v2214 = vpop.f32.mrb[0].mxu0
    %2215 = vdwg.mxu0
    %2216 = vmatprep.subr.bf16.mxu0 %v2043
    %2217 = vmatpush1.bf16.msra.mxu0 %v2042
    %2218 = vmatprep.subr.bf16.mxu0 %v2049
    %2219 = vmatpush1.bf16.msra.mxu0 %v2048
    %2220 = vmatprep.subr.bf16.mxu0 %v2055
    %2221 = vmatpush1.bf16.msra.mxu0 %v2054
    %2222 = vmatprep.subr.bf16.mxu0 %v2061
    %2223 = vmatpush1.bf16.msra.mxu0 %v2060
    %2224 = vmatprep.subr.bf16.mxu0 %v2067
    %2225 = vmatpush1.bf16.msra.mxu0 %v2066
    %2226 = vmatprep.subr.bf16.mxu0 %v2073
    %2227 = vmatpush1.bf16.msra.mxu0 %v2072
    %2228 = vmatprep.subr.bf16.mxu0 %v2079
    %2229 = vmatpush1.bf16.msra.mxu0 %v2078
    %2230 = vmatprep.subr.bf16.mxu0 %v2085
    %2231 = vmatpush1.bf16.msra.mxu0 %v2084
    %2232 = vmatprep.subr.bf16.mxu0 0
    %2233 = vmatpush1.bf16.msra.mxu0 0
    %2234 = vmatprep.subr.bf16.mxu0 0
    %2235 = vmatpush1.bf16.msra.mxu0 0
    %2236 = vmatprep.subr.bf16.mxu0 0
    %2237 = vmatpush1.bf16.msra.mxu0 0
    %2238 = vmatprep.subr.bf16.mxu0 0
    %2239 = vmatpush1.bf16.msra.mxu0 0
    %2240 = vmatprep.subr.bf16.mxu0 0
    %2241 = vmatpush1.bf16.msra.mxu0 0
    %2242 = vmatprep.subr.bf16.mxu0 0
    %2243 = vmatpush1.bf16.msra.mxu0 0
    %2244 = vmatprep.subr.bf16.mxu0 0
    %2245 = vmatpush1.bf16.msra.mxu0 0
    %2246 = vmatprep.subr.bf16.mxu0 0
    %2247 = vmatpush1.bf16.msra.mxu0 0
    %2248 = vmatprep.mubr.bf16.mxu0 0
    %2249 = vmatmul.mubr.bf16.gmra.mrb[0].mxu0 %v1844
    %v2250 = vpop.f32.mrb[0].mxu0
    %v2251 = vadd.f32 0.0, %v2250
    %v2252 = vpop.f32.mrb[0].mxu0
    %v2253 = vadd.f32 0.0, %v2252
    %v2254 = vpop.f32.mrb[0].mxu0
    %v2255 = vpop.f32.mrb[0].mxu0
    %2256 = vdwg.mxu0
    %v2257 = vadd.f32 %v1778, %v2169
    %v2258 = vadd.f32 %v1779, %v2171
    %v2259 = vadd.f32 %v1780, %v2210
    %v2260 = vadd.f32 %v1781, %v2212
    %v2261 = vadd.f32 %v1782, %v2251
    %v2262 = vadd.f32 %v1783, %v2253
    %v2264 = vlaneseq
    %v2265 = vshrl.u32 %v2264, 7
    %v2266 = vsub.s32 0, %v2265
    %v2267 = vrot.slane %v231, %v2266
    %v2268 = vlaneseq
    %v2269 = vshrl.u32 %v2268, 7
    %v2270 = vsub.s32 1, %v2269
    %v2271 = vrot.slane %v231, %v2270
    %v2272 = vlaneseq
    %v2273 = vshrl.u32 %v2272, 7
    %v2274 = vsub.s32 2, %v2273
    %v2275 = vrot.slane %v231, %v2274
    %v2276 = vlaneseq
    %v2277 = vshrl.u32 %v2276, 7
    %v2278 = vsub.s32 3, %v2277
    %v2279 = vrot.slane %v231, %v2278
    %v2280 = vlaneseq
    %v2281 = vshrl.u32 %v2280, 7
    %v2282 = vsub.s32 4, %v2281
    %v2283 = vrot.slane %v231, %v2282
    %v2284 = vlaneseq
    %v2285 = vshrl.u32 %v2284, 7
    %v2286 = vsub.s32 5, %v2285
    %v2287 = vrot.slane %v231, %v2286
    %v2294 = vadd.f32 %v2257, %v2267
    %v2295 = vadd.f32 %v2258, %v2271
    %v2296 = vadd.f32 %v2259, %v2275
    %v2297 = vadd.f32 %v2260, %v2279
    %v2298 = vadd.f32 %v2261, %v2283
    %v2299 = vadd.f32 %v2262, %v2287
    %v2300 = vmax.f32 %v2294, 0.0
    %v2301 = vmax.f32 %v2295, 0.0
    %v2302 = vmax.f32 %v2296, 0.0
    %v2303 = vmax.f32 %v2297, 0.0
    %v2304 = vmax.f32 %v2298, 0.0
    %v2305 = vmax.f32 %v2299, 0.0
    %v2306 = vpack.c.bf16 %v2300, %v2300
    %v2307 = vpack.c.bf16 %v2301, %v2301
    %v2308 = vpack.c.bf16 %v2302, %v2302
    %v2309 = vpack.c.bf16 %v2303, %v2303
    %v2310 = vpack.c.bf16 %v2304, %v2304
    %v2311 = vpack.c.bf16 %v2305, %v2305
    %v2312 = vld [vmem:[#allocation8] sm:$0xf]
    %v2313 = vld [vmem:[#allocation8 + $0x4] sm:$0xf]
    %v2314 = vld [vmem:[#allocation8 + $0x8] sm:$0xf]
    %v2315 = vld [vmem:[#allocation8 + $0xc] sm:$0xf]
    %v2316 = vld [vmem:[#allocation8 + $0x10] sm:$0xf]
    %v2317 = vld [vmem:[#allocation8 + $0x14] sm:$0xf]
    %v2318 = vld [vmem:[#allocation8 + $0x18] sm:$0xf]
    %v2319 = vld [vmem:[#allocation8 + $0x1c] sm:$0xf]
    %v2320 = vld [vmem:[#allocation8 + $0x20] sm:$0xf]
    %v2321 = vld [vmem:[#allocation8 + $0x24] sm:$0xf]
    %v2322 = vld [vmem:[#allocation8 + $0x28] sm:$0xf]
    %v2323 = vld [vmem:[#allocation8 + $0x2c] sm:$0xf]
    %v2324 = vld [vmem:[#allocation8 + $0x30] sm:$0xf]
    %v2325 = vld [vmem:[#allocation8 + $0x34] sm:$0xf]
    %v2326 = vld [vmem:[#allocation8 + $0x38] sm:$0xf]
    %v2327 = vld [vmem:[#allocation8 + $0x3c] sm:$0xf]
    %v2328 = vld [vmem:[#allocation8 + $0x40] sm:$0xf]
    %v2329 = vld [vmem:[#allocation8 + $0x44] sm:$0xf]
    %v2330 = vld [vmem:[#allocation8 + $0x48] sm:$0xf]
    %v2331 = vld [vmem:[#allocation8 + $0x4c] sm:$0xf]
    %v2332 = vld [vmem:[#allocation8 + $0x50] sm:$0xf]
    %v2333 = vld [vmem:[#allocation8 + $0x54] sm:$0xf]
    %v2334 = vld [vmem:[#allocation8 + $0x58] sm:$0xf]
    %v2335 = vld [vmem:[#allocation8 + $0x5c] sm:$0xf]
    %v2336 = vld [vmem:[#allocation8 + $0x60] sm:$0xf]
    %v2337 = vld [vmem:[#allocation8 + $0x64] sm:$0xf]
    %v2338 = vld [vmem:[#allocation8 + $0x68] sm:$0xf]
    %v2339 = vld [vmem:[#allocation8 + $0x6c] sm:$0xf]
    %v2340 = vld [vmem:[#allocation8 + $0x70] sm:$0xf]
    %v2341 = vld [vmem:[#allocation8 + $0x74] sm:$0xf]
    %v2342 = vld [vmem:[#allocation8 + $0x78] sm:$0xf]
    %v2343 = vld [vmem:[#allocation8 + $0x7c] sm:$0xf]
    %v2344 = vld [vmem:[#allocation8 + $0x80] sm:$0xf]
    %v2345 = vld [vmem:[#allocation8 + $0x84] sm:$0xf]
    %v2346 = vld [vmem:[#allocation8 + $0x88] sm:$0xf]
    %v2347 = vld [vmem:[#allocation8 + $0x8c] sm:$0xf]
    %v2348 = vld [vmem:[#allocation8 + $0x90] sm:$0xf]
    %v2349 = vld [vmem:[#allocation8 + $0x94] sm:$0xf]
    %v2350 = vld [vmem:[#allocation8 + $0x98] sm:$0xf]
    %v2351 = vld [vmem:[#allocation8 + $0x9c] sm:$0xf]
    %v2352 = vld [vmem:[#allocation8 + $0xa0] sm:$0xf]
    %v2353 = vld [vmem:[#allocation8 + $0xa4] sm:$0xf]
    %v2354 = vld [vmem:[#allocation8 + $0xa8] sm:$0xf]
    %v2355 = vld [vmem:[#allocation8 + $0xac] sm:$0xf]
    %v2356 = vld [vmem:[#allocation8 + $0xb0] sm:$0xf]
    %v2357 = vld [vmem:[#allocation8 + $0xb4] sm:$0xf]
    %v2358 = vld [vmem:[#allocation8 + $0xb8] sm:$0xf]
    %v2359 = vld [vmem:[#allocation8 + $0xbc] sm:$0xf]
    %v2360 = vld [vmem:[#allocation8 + $0xc0] sm:$0xf]
    %v2361 = vld [vmem:[#allocation8 + $0xc4] sm:$0xf]
    %v2362 = vld [vmem:[#allocation8 + $0xc8] sm:$0xf]
    %v2363 = vld [vmem:[#allocation8 + $0xcc] sm:$0xf]
    %v2364 = vld [vmem:[#allocation8 + $0xd0] sm:$0xf]
    %v2365 = vld [vmem:[#allocation8 + $0xd4] sm:$0xf]
    %v2366 = vld [vmem:[#allocation8 + $0xd8] sm:$0xf]
    %v2367 = vld [vmem:[#allocation8 + $0xdc] sm:$0xf]
    %v2368 = vld [vmem:[#allocation8 + $0xe0] sm:$0xf]
    %v2369 = vld [vmem:[#allocation8 + $0xe4] sm:$0xf]
    %v2370 = vld [vmem:[#allocation8 + $0xe8] sm:$0xf]
    %v2371 = vld [vmem:[#allocation8 + $0xec] sm:$0xf]
    %v2372 = vld [vmem:[#allocation8 + $0xf0] sm:$0xf]
    %v2373 = vld [vmem:[#allocation8 + $0xf4] sm:$0xf]
    %v2374 = vld [vmem:[#allocation8 + $0xf8] sm:$0xf]
    %v2375 = vld [vmem:[#allocation8 + $0xfc] sm:$0xf]
    %v2376 = vld [vmem:[#allocation8 + $0x100] sm:$0xf]
    %v2377 = vld [vmem:[#allocation8 + $0x104] sm:$0xf]
    %v2378 = vld [vmem:[#allocation8 + $0x108] sm:$0xf]
    %v2379 = vld [vmem:[#allocation8 + $0x10c] sm:$0xf]
    %v2380 = vld [vmem:[#allocation8 + $0x110] sm:$0xf]
    %v2381 = vld [vmem:[#allocation8 + $0x114] sm:$0xf]
    %v2382 = vld [vmem:[#allocation8 + $0x118] sm:$0xf]
    %v2383 = vld [vmem:[#allocation8 + $0x11c] sm:$0xf]
    %v2384 = vld [vmem:[#allocation8 + $0x120] sm:$0xf]
    %v2385 = vld [vmem:[#allocation8 + $0x124] sm:$0xf]
    %v2386 = vld [vmem:[#allocation8 + $0x128] sm:$0xf]
    %v2387 = vld [vmem:[#allocation8 + $0x12c] sm:$0xf]
    %v2388 = vld [vmem:[#allocation8 + $0x130] sm:$0xf]
    %v2389 = vld [vmem:[#allocation8 + $0x134] sm:$0xf]
    %v2390 = vld [vmem:[#allocation8 + $0x138] sm:$0xf]
    %v2391 = vld [vmem:[#allocation8 + $0x13c] sm:$0xf]
    %v2392 = vld [vmem:[#allocation8 + $0x140] sm:$0xf]
    %v2393 = vld [vmem:[#allocation8 + $0x144] sm:$0xf]
    %v2394 = vld [vmem:[#allocation8 + $0x148] sm:$0xf]
    %v2395 = vld [vmem:[#allocation8 + $0x14c] sm:$0xf]
    %v2396 = vld [vmem:[#allocation8 + $0x150] sm:$0xf]
    %v2397 = vld [vmem:[#allocation8 + $0x154] sm:$0xf]
    %v2398 = vld [vmem:[#allocation8 + $0x158] sm:$0xf]
    %v2399 = vld [vmem:[#allocation8 + $0x15c] sm:$0xf]
    %v2400 = vld [vmem:[#allocation8 + $0x160] sm:$0xf]
    %v2401 = vld [vmem:[#allocation8 + $0x164] sm:$0xf]
    %v2402 = vld [vmem:[#allocation8 + $0x168] sm:$0xf]
    %v2403 = vld [vmem:[#allocation8 + $0x16c] sm:$0xf]
    %v2404 = vld [vmem:[#allocation8 + $0x170] sm:$0xf]
    %v2405 = vld [vmem:[#allocation8 + $0x174] sm:$0xf]
    %v2406 = vld [vmem:[#allocation8 + $0x178] sm:$0xf]
    %v2407 = vld [vmem:[#allocation8 + $0x17c] sm:$0xf]
    %v2408 = vld [vmem:[%s6] sm:$0x1]
    %v2410 = vlaneseq
    %v2411 = vshrl.u32 %v2410, 7
    %v2412 = vsub.s32 0, %v2411
    %v2413 = vrot.slane %v2408, %v2412
    %v2511 = vunpack.c.l.b16 %v2312
    %v2512 = vunpack.c.l.b16 %v2313
    %v2513 = vunpack.c.l.b16 %v2314
    %v2514 = vunpack.c.l.b16 %v2315
    %v2515 = vunpack.c.l.b16 %v2316
    %v2516 = vunpack.c.l.b16 %v2317
    %v2517 = vunpack.c.l.b16 %v2318
    %v2518 = vunpack.c.l.b16 %v2319
    %v2519 = vunpack.c.l.b16 %v2320
    %v2520 = vunpack.c.l.b16 %v2321
    %v2521 = vunpack.c.l.b16 %v2322
    %v2522 = vunpack.c.l.b16 %v2323
    %v2523 = vunpack.c.l.b16 %v2324
    %v2524 = vunpack.c.l.b16 %v2325
    %v2525 = vunpack.c.l.b16 %v2326
    %v2526 = vunpack.c.l.b16 %v2327
    %v2527 = vunpack.c.l.b16 %v2328
    %v2528 = vunpack.c.l.b16 %v2329
    %v2529 = vunpack.c.l.b16 %v2330
    %v2530 = vunpack.c.l.b16 %v2331
    %v2531 = vunpack.c.l.b16 %v2332
    %v2532 = vunpack.c.l.b16 %v2333
    %v2533 = vunpack.c.l.b16 %v2334
    %v2534 = vunpack.c.l.b16 %v2335
    %v2535 = vunpack.c.l.b16 %v2336
    %v2536 = vunpack.c.l.b16 %v2337
    %v2537 = vunpack.c.l.b16 %v2338
    %v2538 = vunpack.c.l.b16 %v2339
    %v2539 = vunpack.c.l.b16 %v2340
    %v2540 = vunpack.c.l.b16 %v2341
    %v2541 = vunpack.c.l.b16 %v2342
    %v2542 = vunpack.c.l.b16 %v2343
    %v2543 = vunpack.c.l.b16 %v2344
    %v2544 = vunpack.c.l.b16 %v2345
    %v2545 = vunpack.c.l.b16 %v2346
    %v2546 = vunpack.c.l.b16 %v2347
    %v2547 = vunpack.c.l.b16 %v2348
    %v2548 = vunpack.c.l.b16 %v2349
    %v2549 = vunpack.c.l.b16 %v2350
    %v2550 = vunpack.c.l.b16 %v2351
    %v2551 = vunpack.c.l.b16 %v2352
    %v2552 = vunpack.c.l.b16 %v2353
    %v2553 = vunpack.c.l.b16 %v2354
    %v2554 = vunpack.c.l.b16 %v2355
    %v2555 = vunpack.c.l.b16 %v2356
    %v2556 = vunpack.c.l.b16 %v2357
    %v2557 = vunpack.c.l.b16 %v2358
    %v2558 = vunpack.c.l.b16 %v2359
    %v2559 = vunpack.c.l.b16 %v2360
    %v2560 = vunpack.c.l.b16 %v2361
    %v2561 = vunpack.c.l.b16 %v2362
    %v2562 = vunpack.c.l.b16 %v2363
    %v2563 = vunpack.c.l.b16 %v2364
    %v2564 = vunpack.c.l.b16 %v2365
    %v2565 = vunpack.c.l.b16 %v2366
    %v2566 = vunpack.c.l.b16 %v2367
    %v2567 = vunpack.c.l.b16 %v2368
    %v2568 = vunpack.c.l.b16 %v2369
    %v2569 = vunpack.c.l.b16 %v2370
    %v2570 = vunpack.c.l.b16 %v2371
    %v2571 = vunpack.c.l.b16 %v2372
    %v2572 = vunpack.c.l.b16 %v2373
    %v2573 = vunpack.c.l.b16 %v2374
    %v2574 = vunpack.c.l.b16 %v2375
    %v2575 = vunpack.c.l.b16 %v2376
    %v2576 = vunpack.c.l.b16 %v2377
    %v2577 = vunpack.c.l.b16 %v2378
    %v2578 = vunpack.c.l.b16 %v2379
    %v2579 = vunpack.c.l.b16 %v2380
    %v2580 = vunpack.c.l.b16 %v2381
    %v2581 = vunpack.c.l.b16 %v2382
    %v2582 = vunpack.c.l.b16 %v2383
    %v2583 = vunpack.c.l.b16 %v2384
    %v2584 = vunpack.c.l.b16 %v2385
    %v2585 = vunpack.c.l.b16 %v2386
    %v2586 = vunpack.c.l.b16 %v2387
    %v2587 = vunpack.c.l.b16 %v2388
    %v2588 = vunpack.c.l.b16 %v2389
    %v2589 = vunpack.c.l.b16 %v2390
    %v2590 = vunpack.c.l.b16 %v2391
    %v2591 = vunpack.c.l.b16 %v2392
    %v2592 = vunpack.c.l.b16 %v2393
    %v2593 = vunpack.c.l.b16 %v2394
    %v2594 = vunpack.c.l.b16 %v2395
    %v2595 = vunpack.c.l.b16 %v2396
    %v2596 = vunpack.c.l.b16 %v2397
    %v2597 = vunpack.c.l.b16 %v2398
    %v2598 = vunpack.c.l.b16 %v2399
    %v2599 = vunpack.c.l.b16 %v2400
    %v2600 = vunpack.c.l.b16 %v2401
    %v2601 = vunpack.c.l.b16 %v2402
    %v2602 = vunpack.c.l.b16 %v2403
    %v2603 = vunpack.c.l.b16 %v2404
    %v2604 = vunpack.c.l.b16 %v2405
    %v2605 = vunpack.c.l.b16 %v2406
    %v2606 = vunpack.c.l.b16 %v2407
    %v2607 = vpack.c.b16 %v2512, %v2511
    %v2608 = vpack.c.b16 %v2514, %v2513
    %v2609 = vpack.c.b16 %v2516, %v2515
    %v2610 = vpack.c.b16 %v2518, %v2517
    %v2611 = vpack.c.b16 %v2520, %v2519
    %v2612 = vpack.c.b16 %v2522, %v2521
    %v2613 = vpack.c.b16 %v2524, %v2523
    %v2614 = vpack.c.b16 %v2526, %v2525
    %v2615 = vpack.c.b16 %v2528, %v2527
    %v2616 = vpack.c.b16 %v2530, %v2529
    %v2617 = vpack.c.b16 %v2532, %v2531
    %v2618 = vpack.c.b16 %v2534, %v2533
    %v2619 = vpack.c.b16 %v2536, %v2535
    %v2620 = vpack.c.b16 %v2538, %v2537
    %v2621 = vpack.c.b16 %v2540, %v2539
    %v2622 = vpack.c.b16 %v2542, %v2541
    %v2623 = vpack.c.b16 %v2544, %v2543
    %v2624 = vpack.c.b16 %v2546, %v2545
    %v2625 = vpack.c.b16 %v2548, %v2547
    %v2626 = vpack.c.b16 %v2550, %v2549
    %v2627 = vpack.c.b16 %v2552, %v2551
    %v2628 = vpack.c.b16 %v2554, %v2553
    %v2629 = vpack.c.b16 %v2556, %v2555
    %v2630 = vpack.c.b16 %v2558, %v2557
    %v2631 = vpack.c.b16 %v2560, %v2559
    %v2632 = vpack.c.b16 %v2562, %v2561
    %v2633 = vpack.c.b16 %v2564, %v2563
    %v2634 = vpack.c.b16 %v2566, %v2565
    %v2635 = vpack.c.b16 %v2568, %v2567
    %v2636 = vpack.c.b16 %v2570, %v2569
    %v2637 = vpack.c.b16 %v2572, %v2571
    %v2638 = vpack.c.b16 %v2574, %v2573
    %v2639 = vpack.c.b16 %v2576, %v2575
    %v2640 = vpack.c.b16 %v2578, %v2577
    %v2641 = vpack.c.b16 %v2580, %v2579
    %v2642 = vpack.c.b16 %v2582, %v2581
    %v2643 = vpack.c.b16 %v2584, %v2583
    %v2644 = vpack.c.b16 %v2586, %v2585
    %v2645 = vpack.c.b16 %v2588, %v2587
    %v2646 = vpack.c.b16 %v2590, %v2589
    %v2647 = vpack.c.b16 %v2592, %v2591
    %v2648 = vpack.c.b16 %v2594, %v2593
    %v2649 = vpack.c.b16 %v2596, %v2595
    %v2650 = vpack.c.b16 %v2598, %v2597
    %v2651 = vpack.c.b16 %v2600, %v2599
    %v2652 = vpack.c.b16 %v2602, %v2601
    %v2653 = vpack.c.b16 %v2604, %v2603
    %v2654 = vpack.c.b16 %v2606, %v2605
    %2703 = vmatprep.subr.bf16.mxu0 0
    %2704 = vmatpush1.bf16.msra.mxu0 %v2607
    %2705 = vmatprep.subr.bf16.mxu0 0
    %2706 = vmatpush1.bf16.msra.mxu0 %v2608
    %2707 = vmatprep.subr.bf16.mxu0 0
    %2708 = vmatpush1.bf16.msra.mxu0 %v2609
    %2709 = vmatprep.subr.bf16.mxu0 0
    %2710 = vmatpush1.bf16.msra.mxu0 %v2610
    %2711 = vmatprep.subr.bf16.mxu0 0
    %2712 = vmatpush1.bf16.msra.mxu0 %v2611
    %2713 = vmatprep.subr.bf16.mxu0 0
    %2714 = vmatpush1.bf16.msra.mxu0 %v2612
    %2715 = vmatprep.subr.bf16.mxu0 0
    %2716 = vmatpush1.bf16.msra.mxu0 %v2613
    %2717 = vmatprep.subr.bf16.mxu0 0
    %2718 = vmatpush1.bf16.msra.mxu0 %v2614
    %2719 = vmatprep.subr.bf16.mxu0 0
    %2720 = vmatpush1.bf16.msra.mxu0 %v2615
    %2721 = vmatprep.subr.bf16.mxu0 0
    %2722 = vmatpush1.bf16.msra.mxu0 %v2616
    %2723 = vmatprep.subr.bf16.mxu0 0
    %2724 = vmatpush1.bf16.msra.mxu0 %v2617
    %2725 = vmatprep.subr.bf16.mxu0 0
    %2726 = vmatpush1.bf16.msra.mxu0 %v2618
    %2727 = vmatprep.subr.bf16.mxu0 0
    %2728 = vmatpush1.bf16.msra.mxu0 %v2619
    %2729 = vmatprep.subr.bf16.mxu0 0
    %2730 = vmatpush1.bf16.msra.mxu0 %v2620
    %2731 = vmatprep.subr.bf16.mxu0 0
    %2732 = vmatpush1.bf16.msra.mxu0 %v2621
    %2733 = vmatprep.subr.bf16.mxu0 0
    %2734 = vmatpush1.bf16.msra.mxu0 %v2622
    %2735 = vmatprep.mubr.bf16.mxu0 %v2307
    %2736 = vmatmul.mubr.bf16.gmra.mrb[0].mxu0 %v2306
    %v2737 = vpop.f32.mrb[0].mxu0
    %v2738 = vadd.f32 %v2413, %v2737
    %v2739 = vpop.f32.mrb[0].mxu0
    %v2740 = vpop.f32.mrb[0].mxu0
    %v2741 = vpop.f32.mrb[0].mxu0
    %2742 = vdwg.mxu0
    %2743 = vmatprep.subr.bf16.mxu0 0
    %2744 = vmatpush1.bf16.msra.mxu0 %v2623
    %2745 = vmatprep.subr.bf16.mxu0 0
    %2746 = vmatpush1.bf16.msra.mxu0 %v2624
    %2747 = vmatprep.subr.bf16.mxu0 0
    %2748 = vmatpush1.bf16.msra.mxu0 %v2625
    %2749 = vmatprep.subr.bf16.mxu0 0
    %2750 = vmatpush1.bf16.msra.mxu0 %v2626
    %2751 = vmatprep.subr.bf16.mxu0 0
    %2752 = vmatpush1.bf16.msra.mxu0 %v2627
    %2753 = vmatprep.subr.bf16.mxu0 0
    %2754 = vmatpush1.bf16.msra.mxu0 %v2628
    %2755 = vmatprep.subr.bf16.mxu0 0
    %2756 = vmatpush1.bf16.msra.mxu0 %v2629
    %2757 = vmatprep.subr.bf16.mxu0 0
    %2758 = vmatpush1.bf16.msra.mxu0 %v2630
    %2759 = vmatprep.subr.bf16.mxu0 0
    %2760 = vmatpush1.bf16.msra.mxu0 %v2631
    %2761 = vmatprep.subr.bf16.mxu0 0
    %2762 = vmatpush1.bf16.msra.mxu0 %v2632
    %2763 = vmatprep.subr.bf16.mxu0 0
    %2764 = vmatpush1.bf16.msra.mxu0 %v2633
    %2765 = vmatprep.subr.bf16.mxu0 0
    %2766 = vmatpush1.bf16.msra.mxu0 %v2634
    %2767 = vmatprep.subr.bf16.mxu0 0
    %2768 = vmatpush1.bf16.msra.mxu0 %v2635
    %2769 = vmatprep.subr.bf16.mxu0 0
    %2770 = vmatpush1.bf16.msra.mxu0 %v2636
    %2771 = vmatprep.subr.bf16.mxu0 0
    %2772 = vmatpush1.bf16.msra.mxu0 %v2637
    %2773 = vmatprep.subr.bf16.mxu0 0
    %2774 = vmatpush1.bf16.msra.mxu0 %v2638
    %2775 = vmatprep.mubr.bf16.mxu0 %v2309
    %2776 = vmatmul.mubr.bf16.gmra.mrb[0].mxu0 %v2308
    %v2777 = vpop.f32.mrb[0].mxu0
    %v2778 = vadd.f32 %v2738, %v2777
    %v2779 = vpop.f32.mrb[0].mxu0
    %v2780 = vpop.f32.mrb[0].mxu0
    %v2781 = vpop.f32.mrb[0].mxu0
    %2782 = vdwg.mxu0
    %2783 = vmatprep.subr.bf16.mxu0 0
    %2784 = vmatpush1.bf16.msra.mxu0 %v2639
    %2785 = vmatprep.subr.bf16.mxu0 0
    %2786 = vmatpush1.bf16.msra.mxu0 %v2640
    %2787 = vmatprep.subr.bf16.mxu0 0
    %2788 = vmatpush1.bf16.msra.mxu0 %v2641
    %2789 = vmatprep.subr.bf16.mxu0 0
    %2790 = vmatpush1.bf16.msra.mxu0 %v2642
    %2791 = vmatprep.subr.bf16.mxu0 0
    %2792 = vmatpush1.bf16.msra.mxu0 %v2643
    %2793 = vmatprep.subr.bf16.mxu0 0
    %2794 = vmatpush1.bf16.msra.mxu0 %v2644
    %2795 = vmatprep.subr.bf16.mxu0 0
    %2796 = vmatpush1.bf16.msra.mxu0 %v2645
    %2797 = vmatprep.subr.bf16.mxu0 0
    %2798 = vmatpush1.bf16.msra.mxu0 %v2646
    %2799 = vmatprep.subr.bf16.mxu0 0
    %2800 = vmatpush1.bf16.msra.mxu0 %v2647
    %2801 = vmatprep.subr.bf16.mxu0 0
    %2802 = vmatpush1.bf16.msra.mxu0 %v2648
    %2803 = vmatprep.subr.bf16.mxu0 0
    %2804 = vmatpush1.bf16.msra.mxu0 %v2649
    %2805 = vmatprep.subr.bf16.mxu0 0
    %2806 = vmatpush1.bf16.msra.mxu0 %v2650
    %2807 = vmatprep.subr.bf16.mxu0 0
    %2808 = vmatpush1.bf16.msra.mxu0 %v2651
    %2809 = vmatprep.subr.bf16.mxu0 0
    %2810 = vmatpush1.bf16.msra.mxu0 %v2652
    %2811 = vmatprep.subr.bf16.mxu0 0
    %2812 = vmatpush1.bf16.msra.mxu0 %v2653
    %2813 = vmatprep.subr.bf16.mxu0 0
    %2814 = vmatpush1.bf16.msra.mxu0 %v2654
    %2815 = vmatprep.mubr.bf16.mxu0 %v2311
    %2816 = vmatmul.mubr.bf16.gmra.mrb[0].mxu0 %v2310
    %v2817 = vpop.f32.mrb[0].mxu0
    %v2818 = vadd.f32 %v2778, %v2817
    %v2819 = vpop.f32.mrb[0].mxu0
    %v2820 = vpop.f32.mrb[0].mxu0
    %v2821 = vpop.f32.mrb[0].mxu0
    %2822 = vdwg.mxu0
    %2823 = vst [vmem:[#allocation10] sm:$0x3] %v2818
    // Predicated region
    $region46: #{tpu_custom_call.1} parent=1 // pred_check
      _
    $region47: #{tpu_custom_call.1} parent=1 // pred_check_branch
      %2825 = sbr.rel (0) target = $region49
    $region48: #{tpu_custom_call.1} parent=1 // pred_region
      %s2827 = ssub.s32 32, 32
      %2828 = vsyncadd [#allocation4], %s2827
      %s2830 = sshll.u32 [#allocation10], 4
      %s2831 = int_to_ptr.vmem [resolvable:$true] %s2830
      %2833 = dma.vmem_to_hbm [thread:$0]  %s2831, 32, %s7, [#allocation4]
    $region49: #{tpu_custom_call.1} parent=1 // pred_fallthru
      _
    // Predicated region
    $region50: #{tpu_custom_call.1} parent=1 // pred_check
      _
    $region51: #{tpu_custom_call.1} parent=1 // pred_check_branch
      %2835 = sbr.rel (0) target = $region53
    $region52: #{tpu_custom_call.1} parent=1 // pred_region
      %2836 = dma.done [#allocation4], 32
    $region53: #{tpu_custom_call.1} parent=1 // pred_fallthru
      _
    %2837 = vsyncpa [#allocation3], 1
    %2838 = vsyncpa [#allocation6], 1
    %2839 = vsyncpa [#allocation9], 1
    %2840 = vsyncpa [#allocation4], 1

</llo_original>
